<compile_context>
chip_gen: v7x
topology: tpu7x:2x2x1
jax: 0.10.0
libtpu: 0.0.40
codegen_flags: <defaults>
</compile_context>

<pallas_src>
import functools

import jax
import jax.numpy as jnp
from jax.experimental import pallas as pl
from jax.experimental.pallas import tpu as pltpu


# ----------------------------------------------------------------------------
# Fused VAE kernel: encoder + latent sample + decoder on one row-block
# ----------------------------------------------------------------------------
def _vae_kernel(z_dim,
                state_ref, eps_ref,
                we1, be1, we2, be2, we3, be3, we4, be4,
                wml, bml,
                wd1, bd1, wd2, bd2, wd3, bd3, wd4, bd4,
                dec_out, z_out):
    def mm(a, b):
        return jnp.dot(a, b, preferred_element_type=jnp.float32)

    x = state_ref[...]

    # ---- encoder: Linear/ReLU x3 + final Linear -> h_enc (bm, 2Z) ----
    h = jnp.maximum(mm(x, we1[...]) + be1[...], 0.0)
    h = jnp.maximum(mm(h, we2[...]) + be2[...], 0.0)
    h = jnp.maximum(mm(h, we3[...]) + be3[...], 0.0)
    h_enc = mm(h, we4[...]) + be4[...]

    # ---- fused mu / log_sigma heads: one (2Z, 2Z) matmul, slice lanes ----
    ms = mm(h_enc, wml[...]) + bml[...]          # (bm, 2Z)
    mu = ms[:, :z_dim]
    sigma = jnp.exp(ms[:, z_dim:])
    z = mu + sigma * eps_ref[...]                # reparameterization
    z_out[...] = z

    # ---- decoder: Linear/ReLU x3 + final Linear ----
    d = jnp.maximum(mm(z, wd1[...]) + bd1[...], 0.0)
    d = jnp.maximum(mm(d, wd2[...]) + bd2[...], 0.0)
    d = jnp.maximum(mm(d, wd3[...]) + bd3[...], 0.0)
    dec_out[...] = mm(d, wd4[...]) + bd4[...]


# ----------------------------------------------------------------------------
# Parameter construction (synthetic, PyTorch-default-style init)
# ----------------------------------------------------------------------------
_PARAM_ORDER = ('we1', 'be1', 'we2', 'be2', 'we3', 'be3', 'we4', 'be4',
                'wml', 'bml',
                'wd1', 'bd1', 'wd2', 'bd2', 'wd3', 'bd3', 'wd4', 'bd4')


def init_params(key, state_dim, z_dim):
    keys = iter(jax.random.split(key, 32))

    def lin(fan_in, fan_out):
        s = 1.0 / float(fan_in) ** 0.5
        w = jax.random.uniform(next(keys), (fan_in, fan_out), jnp.float32, -s, s)
        b = jax.random.uniform(next(keys), (1, fan_out), jnp.float32, -s, s)
        return w, b

    p = {}
    # encoder
    p['we1'], p['be1'] = lin(state_dim, 512)
    p['we2'], p['be2'] = lin(512, 256)
    p['we3'], p['be3'] = lin(256, 128)
    p['we4'], p['be4'] = lin(128, 2 * z_dim)
    # _enc_mu / _enc_log_sigma fused column-wise: [mu | log_sigma]
    wmu, bmu = lin(2 * z_dim, z_dim)
    wls, bls = lin(2 * z_dim, z_dim)
    p['wml'] = jnp.concatenate([wmu, wls], axis=1)    # (2Z, 2Z)
    p['bml'] = jnp.concatenate([bmu, bls], axis=1)    # (1, 2Z)
    # decoder
    p['wd1'], p['bd1'] = lin(z_dim, 128)
    p['wd2'], p['bd2'] = lin(128, 256)
    p['wd3'], p['bd3'] = lin(256, 512)
    p['wd4'], p['bd4'] = lin(512, state_dim)
    return p


# ----------------------------------------------------------------------------
# Forward wrapper
# ----------------------------------------------------------------------------
def vae_forward(params, state, eps, *, block_m=8):
    N, Ds = state.shape
    Z = eps.shape[-1]
    assert N % block_m == 0, "batch must be a multiple of block_m (pad host-side)"

    row_map = lambda i: (i, 0)      # row-block over the batch
    full_map = lambda i: (0, 0)     # weights/biases: VMEM-resident, no re-fetch

    weight_args = [params[name] for name in _PARAM_ORDER]

    in_specs = ([pl.BlockSpec((block_m, Ds), row_map),
                 pl.BlockSpec((block_m, Z), row_map)]
                + [pl.BlockSpec(w.shape, full_map) for w in weight_args])
    out_specs = (pl.BlockSpec((block_m, Ds), row_map),
                 pl.BlockSpec((block_m, Z), row_map))
    out_shape = (jax.ShapeDtypeStruct((N, Ds), jnp.float32),
                 jax.ShapeDtypeStruct((N, Z), jnp.float32))

    dec, z = pl.pallas_call(
        functools.partial(_vae_kernel, Z),
        grid=(pl.cdiv(N, block_m),),
        in_specs=in_specs,
        out_specs=out_specs,
        out_shape=out_shape,
        compiler_params=pltpu.CompilerParams(
            dimension_semantics=("parallel",)),   # lets v7x shard rows over 2 TCs
    )(state, eps, *weight_args)
    return dec, z


# ----------------------------------------------------------------------------
# Pure-JAX reference (same math, for a sanity check)
# ----------------------------------------------------------------------------
def vae_reference(params, state, eps, z_dim):
    relu = lambda t: jnp.maximum(t, 0.0)
    h = relu(state @ params['we1'] + params['be1'])
    h = relu(h @ params['we2'] + params['be2'])
    h = relu(h @ params['we3'] + params['be3'])
    h_enc = h @ params['we4'] + params['be4']
    ms = h_enc @ params['wml'] + params['bml']
    z = ms[:, :z_dim] + jnp.exp(ms[:, z_dim:]) * eps
    d = relu(z @ params['wd1'] + params['bd1'])
    d = relu(d @ params['wd2'] + params['bd2'])
    d = relu(d @ params['wd3'] + params['bd3'])
    return d @ params['wd4'] + params['bd4'], z


if __name__ == "__main__":
    # args.state_shape = 128, args.vae_hidden_num = 32
    STATE_DIM = 128
    Z_DIM = 32
    BATCH = 16           # sublane-full; grid of 2 row-blocks of 8
    BLOCK_M = 8

    key = jax.random.PRNGKey(0)
    kp, ks, ke = jax.random.split(key, 3)

    params = init_params(kp, STATE_DIM, Z_DIM)
    state = jax.random.normal(ks, (BATCH, STATE_DIM), jnp.float32)
    # eps ~ N(0,1): host-side RNG in the PyTorch module, passed as input here.
    eps = jax.random.normal(ke, (BATCH, Z_DIM), jnp.float32)

    dec, z = jax.block_until_ready(
        vae_forward(params, state, eps, block_m=BLOCK_M))

    assert dec.shape == (BATCH, STATE_DIM)
    assert z.shape == (BATCH, Z_DIM)
    assert bool(jnp.all(jnp.isfinite(dec))) and bool(jnp.all(jnp.isfinite(z)))

    dec_ref, z_ref = vae_reference(params, state, eps, Z_DIM)
    assert float(jnp.max(jnp.abs(dec - dec_ref))) < 5e-2
    assert float(jnp.max(jnp.abs(z - z_ref))) < 5e-2

    print("KERNEL_OK")
</pallas_src>

<mosaic_0001>
module attributes {stable_mosaic.version = 11 : i64} {
  func.func @_vae_kernel(%arg0: i32, %arg1: memref<8x128xf32, #tpu.memory_space<vmem>>, %arg2: memref<8x32xf32, #tpu.memory_space<vmem>>, %arg3: memref<128x512xf32, #tpu.memory_space<vmem>>, %arg4: memref<1x512xf32, #tpu.memory_space<vmem>>, %arg5: memref<512x256xf32, #tpu.memory_space<vmem>>, %arg6: memref<1x256xf32, #tpu.memory_space<vmem>>, %arg7: memref<256x128xf32, #tpu.memory_space<vmem>>, %arg8: memref<1x128xf32, #tpu.memory_space<vmem>>, %arg9: memref<128x64xf32, #tpu.memory_space<vmem>>, %arg10: memref<1x64xf32, #tpu.memory_space<vmem>>, %arg11: memref<64x64xf32, #tpu.memory_space<vmem>>, %arg12: memref<1x64xf32, #tpu.memory_space<vmem>>, %arg13: memref<32x128xf32, #tpu.memory_space<vmem>>, %arg14: memref<1x128xf32, #tpu.memory_space<vmem>>, %arg15: memref<128x256xf32, #tpu.memory_space<vmem>>, %arg16: memref<1x256xf32, #tpu.memory_space<vmem>>, %arg17: memref<256x512xf32, #tpu.memory_space<vmem>>, %arg18: memref<1x512xf32, #tpu.memory_space<vmem>>, %arg19: memref<512x128xf32, #tpu.memory_space<vmem>>, %arg20: memref<1x128xf32, #tpu.memory_space<vmem>>, %arg21: memref<8x128xf32, #tpu.memory_space<vmem>>, %arg22: memref<8x32xf32, #tpu.memory_space<vmem>>) attributes {dimension_semantics = [#tpu.dimension_semantics<parallel>], iteration_bounds = array<i64: 2>, scalar_prefetch = 0 : i64, scratch_operands = 0 : i64, tpu.core_type = #tpu.core_type<tc>, window_params = [{transform_indices = @transform_0, window_bounds = array<i64: 8, 128>}, {transform_indices = @transform_1, window_bounds = array<i64: 8, 32>}, {pipeline_mode = #tpu.pipeline_mode<synchronous>, transform_indices = @transform_2, window_bounds = array<i64: 128, 512>}, {pipeline_mode = #tpu.pipeline_mode<synchronous>, transform_indices = @transform_3, window_bounds = array<i64: 1, 512>}, {pipeline_mode = #tpu.pipeline_mode<synchronous>, transform_indices = @transform_4, window_bounds = array<i64: 512, 256>}, {pipeline_mode = #tpu.pipeline_mode<synchronous>, transform_indices = @transform_5, window_bounds = array<i64: 1, 256>}, {pipeline_mode = #tpu.pipeline_mode<synchronous>, transform_indices = @transform_6, window_bounds = array<i64: 256, 128>}, {pipeline_mode = #tpu.pipeline_mode<synchronous>, transform_indices = @transform_7, window_bounds = array<i64: 1, 128>}, {pipeline_mode = #tpu.pipeline_mode<synchronous>, transform_indices = @transform_8, window_bounds = array<i64: 128, 64>}, {pipeline_mode = #tpu.pipeline_mode<synchronous>, transform_indices = @transform_9, window_bounds = array<i64: 1, 64>}, {pipeline_mode = #tpu.pipeline_mode<synchronous>, transform_indices = @transform_10, window_bounds = array<i64: 64, 64>}, {pipeline_mode = #tpu.pipeline_mode<synchronous>, transform_indices = @transform_11, window_bounds = array<i64: 1, 64>}, {pipeline_mode = #tpu.pipeline_mode<synchronous>, transform_indices = @transform_12, window_bounds = array<i64: 32, 128>}, {pipeline_mode = #tpu.pipeline_mode<synchronous>, transform_indices = @transform_13, window_bounds = array<i64: 1, 128>}, {pipeline_mode = #tpu.pipeline_mode<synchronous>, transform_indices = @transform_14, window_bounds = array<i64: 128, 256>}, {pipeline_mode = #tpu.pipeline_mode<synchronous>, transform_indices = @transform_15, window_bounds = array<i64: 1, 256>}, {pipeline_mode = #tpu.pipeline_mode<synchronous>, transform_indices = @transform_16, window_bounds = array<i64: 256, 512>}, {pipeline_mode = #tpu.pipeline_mode<synchronous>, transform_indices = @transform_17, window_bounds = array<i64: 1, 512>}, {pipeline_mode = #tpu.pipeline_mode<synchronous>, transform_indices = @transform_18, window_bounds = array<i64: 512, 128>}, {pipeline_mode = #tpu.pipeline_mode<synchronous>, transform_indices = @transform_19, window_bounds = array<i64: 1, 128>}, {transform_indices = @transform_20, window_bounds = array<i64: 8, 128>}, {transform_indices = @transform_21, window_bounds = array<i64: 8, 32>}]} {
    %c0 = arith.constant 0 : index
    %c0_0 = arith.constant 0 : index
    %0 = vector.load %arg1[%c0, %c0_0] : memref<8x128xf32, #tpu.memory_space<vmem>>, vector<8x128xf32>
    %c0_1 = arith.constant 0 : index
    %c0_2 = arith.constant 0 : index
    %1 = vector.load %arg3[%c0_1, %c0_2] : memref<128x512xf32, #tpu.memory_space<vmem>>, vector<128x512xf32>
    %cst = arith.constant dense<0.000000e+00> : vector<8x512xf32>
    %2 = tpu.matmul %0, %1, %cst {dimension_numbers = #tpu.dot_dimension_numbers<[1], [0], [0], [1], [0, 0, 1, 1], [], []>} : vector<8x128xf32>, vector<128x512xf32>, vector<8x512xf32> -> vector<8x512xf32>
    %c0_3 = arith.constant 0 : index
    %c0_4 = arith.constant 0 : index
    %3 = vector.load %arg4[%c0_3, %c0_4] : memref<1x512xf32, #tpu.memory_space<vmem>>, vector<1x512xf32>
    %4 = vector.broadcast %3 : vector<1x512xf32> to vector<8x512xf32>
    %5 = arith.addf %2, %4 : vector<8x512xf32>
    %cst_5 = arith.constant 0.000000e+00 : f32
    %6 = vector.broadcast %cst_5 : f32 to vector<8x512xf32>
    %7 = arith.maximumf %5, %6 : vector<8x512xf32>
    %c0_6 = arith.constant 0 : index
    %c0_7 = arith.constant 0 : index
    %8 = vector.load %arg5[%c0_6, %c0_7] : memref<512x256xf32, #tpu.memory_space<vmem>>, vector<512x256xf32>
    %cst_8 = arith.constant dense<0.000000e+00> : vector<8x256xf32>
    %9 = tpu.matmul %7, %8, %cst_8 {dimension_numbers = #tpu.dot_dimension_numbers<[1], [0], [0], [1], [0, 0, 1, 1], [], []>} : vector<8x512xf32>, vector<512x256xf32>, vector<8x256xf32> -> vector<8x256xf32>
    %c0_9 = arith.constant 0 : index
    %c0_10 = arith.constant 0 : index
    %10 = vector.load %arg6[%c0_9, %c0_10] : memref<1x256xf32, #tpu.memory_space<vmem>>, vector<1x256xf32>
    %11 = vector.broadcast %10 : vector<1x256xf32> to vector<8x256xf32>
    %12 = arith.addf %9, %11 : vector<8x256xf32>
    %cst_11 = arith.constant 0.000000e+00 : f32
    %13 = vector.broadcast %cst_11 : f32 to vector<8x256xf32>
    %14 = arith.maximumf %12, %13 : vector<8x256xf32>
    %c0_12 = arith.constant 0 : index
    %c0_13 = arith.constant 0 : index
    %15 = vector.load %arg7[%c0_12, %c0_13] : memref<256x128xf32, #tpu.memory_space<vmem>>, vector<256x128xf32>
    %cst_14 = arith.constant dense<0.000000e+00> : vector<8x128xf32>
    %16 = tpu.matmul %14, %15, %cst_14 {dimension_numbers = #tpu.dot_dimension_numbers<[1], [0], [0], [1], [0, 0, 1, 1], [], []>} : vector<8x256xf32>, vector<256x128xf32>, vector<8x128xf32> -> vector<8x128xf32>
    %c0_15 = arith.constant 0 : index
    %c0_16 = arith.constant 0 : index
    %17 = vector.load %arg8[%c0_15, %c0_16] : memref<1x128xf32, #tpu.memory_space<vmem>>, vector<1x128xf32>
    %18 = vector.broadcast %17 : vector<1x128xf32> to vector<8x128xf32>
    %19 = arith.addf %16, %18 : vector<8x128xf32>
    %cst_17 = arith.constant 0.000000e+00 : f32
    %20 = vector.broadcast %cst_17 : f32 to vector<8x128xf32>
    %21 = arith.maximumf %19, %20 : vector<8x128xf32>
    %c0_18 = arith.constant 0 : index
    %c0_19 = arith.constant 0 : index
    %22 = vector.load %arg9[%c0_18, %c0_19] : memref<128x64xf32, #tpu.memory_space<vmem>>, vector<128x64xf32>
    %cst_20 = arith.constant dense<0.000000e+00> : vector<8x64xf32>
    %23 = tpu.matmul %21, %22, %cst_20 {dimension_numbers = #tpu.dot_dimension_numbers<[1], [0], [0], [1], [0, 0, 1, 1], [], []>} : vector<8x128xf32>, vector<128x64xf32>, vector<8x64xf32> -> vector<8x64xf32>
    %c0_21 = arith.constant 0 : index
    %c0_22 = arith.constant 0 : index
    %24 = vector.load %arg10[%c0_21, %c0_22] : memref<1x64xf32, #tpu.memory_space<vmem>>, vector<1x64xf32>
    %25 = vector.broadcast %24 : vector<1x64xf32> to vector<8x64xf32>
    %26 = arith.addf %23, %25 : vector<8x64xf32>
    %c0_23 = arith.constant 0 : index
    %c0_24 = arith.constant 0 : index
    %27 = vector.load %arg11[%c0_23, %c0_24] : memref<64x64xf32, #tpu.memory_space<vmem>>, vector<64x64xf32>
    %cst_25 = arith.constant dense<0.000000e+00> : vector<8x64xf32>
    %28 = tpu.matmul %26, %27, %cst_25 {dimension_numbers = #tpu.dot_dimension_numbers<[1], [0], [0], [1], [0, 0, 1, 1], [], []>} : vector<8x64xf32>, vector<64x64xf32>, vector<8x64xf32> -> vector<8x64xf32>
    %c0_26 = arith.constant 0 : index
    %c0_27 = arith.constant 0 : index
    %29 = vector.load %arg12[%c0_26, %c0_27] : memref<1x64xf32, #tpu.memory_space<vmem>>, vector<1x64xf32>
    %30 = vector.broadcast %29 : vector<1x64xf32> to vector<8x64xf32>
    %31 = arith.addf %28, %30 : vector<8x64xf32>
    %32 = vector.extract_strided_slice %31 {offsets = [0, 0], sizes = [8, 32], strides = [1, 1]} : vector<8x64xf32> to vector<8x32xf32>
    %33 = vector.extract_strided_slice %31 {offsets = [0, 32], sizes = [8, 32], strides = [1, 1]} : vector<8x64xf32> to vector<8x32xf32>
    %34 = math.exp %33 : vector<8x32xf32>
    %c0_28 = arith.constant 0 : index
    %c0_29 = arith.constant 0 : index
    %35 = vector.load %arg2[%c0_28, %c0_29] : memref<8x32xf32, #tpu.memory_space<vmem>>, vector<8x32xf32>
    %36 = arith.mulf %34, %35 : vector<8x32xf32>
    %37 = arith.addf %32, %36 : vector<8x32xf32>
    %c0_30 = arith.constant 0 : index
    %c0_31 = arith.constant 0 : index
    %38 = vector.load %arg22[%c0_30, %c0_31] : memref<8x32xf32, #tpu.memory_space<vmem>>, vector<8x32xf32>
    tpu.vector_store %arg22[%c0_30, %c0_31], %37 {strides = array<i32>} : memref<8x32xf32, #tpu.memory_space<vmem>>, vector<8x32xf32>,
    %c0_32 = arith.constant 0 : index
    %c0_33 = arith.constant 0 : index
    %39 = vector.load %arg13[%c0_32, %c0_33] : memref<32x128xf32, #tpu.memory_space<vmem>>, vector<32x128xf32>
    %cst_34 = arith.constant dense<0.000000e+00> : vector<8x128xf32>
    %40 = tpu.matmul %37, %39, %cst_34 {dimension_numbers = #tpu.dot_dimension_numbers<[1], [0], [0], [1], [0, 0, 1, 1], [], []>} : vector<8x32xf32>, vector<32x128xf32>, vector<8x128xf32> -> vector<8x128xf32>
    %c0_35 = arith.constant 0 : index
    %c0_36 = arith.constant 0 : index
    %41 = vector.load %arg14[%c0_35, %c0_36] : memref<1x128xf32, #tpu.memory_space<vmem>>, vector<1x128xf32>
    %42 = vector.broadcast %41 : vector<1x128xf32> to vector<8x128xf32>
    %43 = arith.addf %40, %42 : vector<8x128xf32>
    %cst_37 = arith.constant 0.000000e+00 : f32
    %44 = vector.broadcast %cst_37 : f32 to vector<8x128xf32>
    %45 = arith.maximumf %43, %44 : vector<8x128xf32>
    %c0_38 = arith.constant 0 : index
    %c0_39 = arith.constant 0 : index
    %46 = vector.load %arg15[%c0_38, %c0_39] : memref<128x256xf32, #tpu.memory_space<vmem>>, vector<128x256xf32>
    %cst_40 = arith.constant dense<0.000000e+00> : vector<8x256xf32>
    %47 = tpu.matmul %45, %46, %cst_40 {dimension_numbers = #tpu.dot_dimension_numbers<[1], [0], [0], [1], [0, 0, 1, 1], [], []>} : vector<8x128xf32>, vector<128x256xf32>, vector<8x256xf32> -> vector<8x256xf32>
    %c0_41 = arith.constant 0 : index
    %c0_42 = arith.constant 0 : index
    %48 = vector.load %arg16[%c0_41, %c0_42] : memref<1x256xf32, #tpu.memory_space<vmem>>, vector<1x256xf32>
    %49 = vector.broadcast %48 : vector<1x256xf32> to vector<8x256xf32>
    %50 = arith.addf %47, %49 : vector<8x256xf32>
    %cst_43 = arith.constant 0.000000e+00 : f32
    %51 = vector.broadcast %cst_43 : f32 to vector<8x256xf32>
    %52 = arith.maximumf %50, %51 : vector<8x256xf32>
    %c0_44 = arith.constant 0 : index
    %c0_45 = arith.constant 0 : index
    %53 = vector.load %arg17[%c0_44, %c0_45] : memref<256x512xf32, #tpu.memory_space<vmem>>, vector<256x512xf32>
    %cst_46 = arith.constant dense<0.000000e+00> : vector<8x512xf32>
    %54 = tpu.matmul %52, %53, %cst_46 {dimension_numbers = #tpu.dot_dimension_numbers<[1], [0], [0], [1], [0, 0, 1, 1], [], []>} : vector<8x256xf32>, vector<256x512xf32>, vector<8x512xf32> -> vector<8x512xf32>
    %c0_47 = arith.constant 0 : index
    %c0_48 = arith.constant 0 : index
    %55 = vector.load %arg18[%c0_47, %c0_48] : memref<1x512xf32, #tpu.memory_space<vmem>>, vector<1x512xf32>
    %56 = vector.broadcast %55 : vector<1x512xf32> to vector<8x512xf32>
    %57 = arith.addf %54, %56 : vector<8x512xf32>
    %cst_49 = arith.constant 0.000000e+00 : f32
    %58 = vector.broadcast %cst_49 : f32 to vector<8x512xf32>
    %59 = arith.maximumf %57, %58 : vector<8x512xf32>
    %c0_50 = arith.constant 0 : index
    %c0_51 = arith.constant 0 : index
    %60 = vector.load %arg19[%c0_50, %c0_51] : memref<512x128xf32, #tpu.memory_space<vmem>>, vector<512x128xf32>
    %cst_52 = arith.constant dense<0.000000e+00> : vector<8x128xf32>
    %61 = tpu.matmul %59, %60, %cst_52 {dimension_numbers = #tpu.dot_dimension_numbers<[1], [0], [0], [1], [0, 0, 1, 1], [], []>} : vector<8x512xf32>, vector<512x128xf32>, vector<8x128xf32> -> vector<8x128xf32>
    %c0_53 = arith.constant 0 : index
    %c0_54 = arith.constant 0 : index
    %62 = vector.load %arg20[%c0_53, %c0_54] : memref<1x128xf32, #tpu.memory_space<vmem>>, vector<1x128xf32>
    %63 = vector.broadcast %62 : vector<1x128xf32> to vector<8x128xf32>
    %64 = arith.addf %61, %63 : vector<8x128xf32>
    %c0_55 = arith.constant 0 : index
    %c0_56 = arith.constant 0 : index
    %65 = vector.load %arg21[%c0_55, %c0_56] : memref<8x128xf32, #tpu.memory_space<vmem>>, vector<8x128xf32>
    tpu.vector_store %arg21[%c0_55, %c0_56], %64 {strides = array<i32>} : memref<8x128xf32, #tpu.memory_space<vmem>>, vector<8x128xf32>,
    return
  }
  func.func @transform_0(%arg0: i32) -> (i32, i32) {
    %c0_i32 = arith.constant 0 : i32
    %c0_i32_0 = arith.constant 0 : i32
    return %arg0, %c0_i32 : i32, i32
  }
  func.func @transform_1(%arg0: i32) -> (i32, i32) {
    %c0_i32 = arith.constant 0 : i32
    %c0_i32_0 = arith.constant 0 : i32
    return %arg0, %c0_i32 : i32, i32
  }
  func.func @transform_2(%arg0: i32) -> (i32, i32) {
    %c0_i32 = arith.constant 0 : i32
    %c0_i32_0 = arith.constant 0 : i32
    %c0_i32_1 = arith.constant 0 : i32
    return %c0_i32, %c0_i32_0 : i32, i32
  }
  func.func @transform_3(%arg0: i32) -> (i32, i32) {
    %c0_i32 = arith.constant 0 : i32
    %c0_i32_0 = arith.constant 0 : i32
    %c0_i32_1 = arith.constant 0 : i32
    return %c0_i32, %c0_i32_0 : i32, i32
  }
  func.func @transform_4(%arg0: i32) -> (i32, i32) {
    %c0_i32 = arith.constant 0 : i32
    %c0_i32_0 = arith.constant 0 : i32
    %c0_i32_1 = arith.constant 0 : i32
    return %c0_i32, %c0_i32_0 : i32, i32
  }
  func.func @transform_5(%arg0: i32) -> (i32, i32) {
    %c0_i32 = arith.constant 0 : i32
    %c0_i32_0 = arith.constant 0 : i32
    %c0_i32_1 = arith.constant 0 : i32
    return %c0_i32, %c0_i32_0 : i32, i32
  }
  func.func @transform_6(%arg0: i32) -> (i32, i32) {
    %c0_i32 = arith.constant 0 : i32
    %c0_i32_0 = arith.constant 0 : i32
    %c0_i32_1 = arith.constant 0 : i32
    return %c0_i32, %c0_i32_0 : i32, i32
  }
  func.func @transform_7(%arg0: i32) -> (i32, i32) {
    %c0_i32 = arith.constant 0 : i32
    %c0_i32_0 = arith.constant 0 : i32
    %c0_i32_1 = arith.constant 0 : i32
    return %c0_i32, %c0_i32_0 : i32, i32
  }
  func.func @transform_8(%arg0: i32) -> (i32, i32) {
    %c0_i32 = arith.constant 0 : i32
    %c0_i32_0 = arith.constant 0 : i32
    %c0_i32_1 = arith.constant 0 : i32
    return %c0_i32, %c0_i32_0 : i32, i32
  }
  func.func @transform_9(%arg0: i32) -> (i32, i32) {
    %c0_i32 = arith.constant 0 : i32
    %c0_i32_0 = arith.constant 0 : i32
    %c0_i32_1 = arith.constant 0 : i32
    return %c0_i32, %c0_i32_0 : i32, i32
  }
  func.func @transform_10(%arg0: i32) -> (i32, i32) {
    %c0_i32 = arith.constant 0 : i32
    %c0_i32_0 = arith.constant 0 : i32
    %c0_i32_1 = arith.constant 0 : i32
    return %c0_i32, %c0_i32_0 : i32, i32
  }
  func.func @transform_11(%arg0: i32) -> (i32, i32) {
    %c0_i32 = arith.constant 0 : i32
    %c0_i32_0 = arith.constant 0 : i32
    %c0_i32_1 = arith.constant 0 : i32
    return %c0_i32, %c0_i32_0 : i32, i32
  }
  func.func @transform_12(%arg0: i32) -> (i32, i32) {
    %c0_i32 = arith.constant 0 : i32
    %c0_i32_0 = arith.constant 0 : i32
    %c0_i32_1 = arith.constant 0 : i32
    return %c0_i32, %c0_i32_0 : i32, i32
  }
  func.func @transform_13(%arg0: i32) -> (i32, i32) {
    %c0_i32 = arith.constant 0 : i32
    %c0_i32_0 = arith.constant 0 : i32
    %c0_i32_1 = arith.constant 0 : i32
    return %c0_i32, %c0_i32_0 : i32, i32
  }
  func.func @transform_14(%arg0: i32) -> (i32, i32) {
    %c0_i32 = arith.constant 0 : i32
    %c0_i32_0 = arith.constant 0 : i32
    %c0_i32_1 = arith.constant 0 : i32
    return %c0_i32, %c0_i32_0 : i32, i32
  }
  func.func @transform_15(%arg0: i32) -> (i32, i32) {
    %c0_i32 = arith.constant 0 : i32
    %c0_i32_0 = arith.constant 0 : i32
    %c0_i32_1 = arith.constant 0 : i32
    return %c0_i32, %c0_i32_0 : i32, i32
  }
  func.func @transform_16(%arg0: i32) -> (i32, i32) {
    %c0_i32 = arith.constant 0 : i32
    %c0_i32_0 = arith.constant 0 : i32
    %c0_i32_1 = arith.constant 0 : i32
    return %c0_i32, %c0_i32_0 : i32, i32
  }
  func.func @transform_17(%arg0: i32) -> (i32, i32) {
    %c0_i32 = arith.constant 0 : i32
    %c0_i32_0 = arith.constant 0 : i32
    %c0_i32_1 = arith.constant 0 : i32
    return %c0_i32, %c0_i32_0 : i32, i32
  }
  func.func @transform_18(%arg0: i32) -> (i32, i32) {
    %c0_i32 = arith.constant 0 : i32
    %c0_i32_0 = arith.constant 0 : i32
    %c0_i32_1 = arith.constant 0 : i32
    return %c0_i32, %c0_i32_0 : i32, i32
  }
  func.func @transform_19(%arg0: i32) -> (i32, i32) {
    %c0_i32 = arith.constant 0 : i32
    %c0_i32_0 = arith.constant 0 : i32
    %c0_i32_1 = arith.constant 0 : i32
    return %c0_i32, %c0_i32_0 : i32, i32
  }
  func.func @transform_20(%arg0: i32) -> (i32, i32) {
    %c0_i32 = arith.constant 0 : i32
    %c0_i32_0 = arith.constant 0 : i32
    return %arg0, %c0_i32 : i32, i32
  }
  func.func @transform_21(%arg0: i32) -> (i32, i32) {
    %c0_i32 = arith.constant 0 : i32
    %c0_i32_0 = arith.constant 0 : i32
    return %arg0, %c0_i32 : i32, i32
  }
}

</mosaic_0001>

<llo_original>
// kernel: tpu_custom_call.1
$region0: #{tpu_custom_call.1}
  #allocation0 [shape = 'u32[]', space=smem, size = 0x4, offset = 0x4, fixed_abs, tag = 'smem constant byte address 0x4 - core index']
  #allocation1 [shape = 'u32[144,128]{1,0:T(1,128)}', space=vmem, size = 0x12000, scoped, tag = 'internal scratch']
  %s0 = inlined_call_operand.vmem [shape: f32[16,128], index: 0, kind: input, shape index: {}]
  %s1 = inlined_call_operand.vmem [shape: f32[16,32], index: 1, kind: input, shape index: {}]
  %s2 = inlined_call_operand.hbm [shape: f32[128,512], index: 2, kind: input, shape index: {}]
  %s3 = inlined_call_operand.vmem [shape: f32[1,512], index: 3, kind: input, shape index: {}]
  %s4 = inlined_call_operand.hbm [shape: f32[512,256], index: 4, kind: input, shape index: {}]
  %s5 = inlined_call_operand.vmem [shape: f32[1,256], index: 5, kind: input, shape index: {}]
  %s6 = inlined_call_operand.hbm [shape: f32[256,128], index: 6, kind: input, shape index: {}]
  %s7 = inlined_call_operand.vmem [shape: f32[1,128], index: 7, kind: input, shape index: {}]
  %s8 = inlined_call_operand.vmem [shape: f32[128,64], index: 8, kind: input, shape index: {}]
  %s9 = inlined_call_operand.vmem [shape: f32[1,64], index: 9, kind: input, shape index: {}]
  %s10 = inlined_call_operand.vmem [shape: f32[64,64], index: 10, kind: input, shape index: {}]
  %s11 = inlined_call_operand.vmem [shape: f32[1,64], index: 11, kind: input, shape index: {}]
  %s12 = inlined_call_operand.vmem [shape: f32[32,128], index: 12, kind: input, shape index: {}]
  %s13 = inlined_call_operand.vmem [shape: f32[1,128], index: 13, kind: input, shape index: {}]
  %s14 = inlined_call_operand.hbm [shape: f32[128,256], index: 14, kind: input, shape index: {}]
  %s15 = inlined_call_operand.vmem [shape: f32[1,256], index: 15, kind: input, shape index: {}]
  %s16 = inlined_call_operand.hbm [shape: f32[256,512], index: 16, kind: input, shape index: {}]
  %s17 = inlined_call_operand.vmem [shape: f32[1,512], index: 17, kind: input, shape index: {}]
  %s18 = inlined_call_operand.hbm [shape: f32[512,128], index: 18, kind: input, shape index: {}]
  %s19 = inlined_call_operand.vmem [shape: f32[1,128], index: 19, kind: input, shape index: {}]
  %s20 = inlined_call_operand.hbm [shape: f32[16,128], index: 20, kind: output, shape index: {0}]
  %s21 = inlined_call_operand.hbm [shape: f32[16,32], index: 21, kind: output, shape index: {1}]
  %22 = xla_tuple %s20, %s21
  %s23 = sld [smem:[#allocation0]]
  $region145: #{tpu_custom_call.1} parent=0
    _
  %s25 = ssub.s32 1, %s23
  %s26 = scalar_select 0, %s25, %s23
  $region1: #{tpu_custom_call.1} parent=0
    #allocation2 [shape = 'u8[262144]{0}', space=vmem, size = 0x40000, scoped, tag = 'input window, operand 2, single buffered']
    #allocation3 [shape = 's32[2]{0}', space=sflag, size = 0x8, scoped, tag = 'scoped memory for tpu_custom_call.1']
    #allocation4 [shape = 's32[2]{0}', space=sflag, size = 0x8, scoped, tag = 'scoped memory for tpu_custom_call.1']
    #allocation5 [shape = 'u8[524288]{0}', space=vmem, size = 0x80000, scoped, tag = 'input window, operand 4, single buffered']
    #allocation6 [shape = 's32[1]{0}', space=sflag, size = 0x4, scoped, tag = 'scoped memory for tpu_custom_call.1']
    #allocation7 [shape = 'u8[131072]{0}', space=vmem, size = 0x20000, scoped, tag = 'input window, operand 6, single buffered']
    #allocation8 [shape = 'u8[131072]{0}', space=vmem, size = 0x20000, scoped, tag = 'input window, operand 14, single buffered']
    #allocation9 [shape = 's32[1]{0}', space=sflag, size = 0x4, scoped, tag = 'scoped memory for tpu_custom_call.1']
    #allocation10 [shape = 'u8[524288]{0}', space=vmem, size = 0x80000, scoped, tag = 'input window, operand 16, single buffered']
    #allocation11 [shape = 'u8[262144]{0}', space=vmem, size = 0x40000, scoped, tag = 'input window, operand 18, single buffered']
    #allocation12 [shape = 's32[1]{0}', space=sflag, size = 0x4, scoped, tag = 'scoped memory for tpu_custom_call.1']
    #allocation13 [shape = 'u8[8192]{0}', space=vmem, size = 0x2000, scoped, tag = 'output window, operand 0']
    #allocation14 [shape = 'u8[8192]{0}', space=vmem, size = 0x2000, scoped, tag = 'output window, operand 1']
    #allocation15 [shape = 's32[2]{0}', space=sflag, size = 0x8, scoped, tag = 'scoped memory for tpu_custom_call.1']
    %27 = vsyncpa [#allocation3], 0
    %28 = vsyncpa [#allocation6], 0
    %29 = vsyncpa [#allocation9], 0
    %30 = vsyncpa [#allocation12], 0
    %31 = vsyncpa [#allocation4], 0
    %s32 = scalar_lea.sflag [#allocation4], 1
    %33 = vsyncpa %s32, 0
    %34 = vsyncpa [#allocation15], 0
    %s35 = scalar_lea.sflag [#allocation15], 1
    %36 = vsyncpa %s35, 0
    loop: start=0, step=1, limit=4
    $region2: #{tpu_custom_call.1} parent=1 // loop_pre_header
      _
    $region3: #{tpu_custom_call.1} parent=1 // loop_header
      %s38 = sphi 0, %s42
      %p39 = scmp.ge.s32.totalorder %s38, 4
      %s48 = sphi 0, %s50
      %s51 = sphi 0, %s48
      %s52 = sphi 0, %s51
      %s68 = sphi 0, %s52
      %s74 = sphi 0, %s76
      %s77 = sphi 0, %s74
      %s78 = sphi 0, %s77
      %s94 = sphi 0, %s78
      %s98 = sphi 0, %s98
      %s100 = sphi 0, %s98
      %s101 = sphi 0, %s100
      %s115 = sphi 0, %s101
      %s119 = sphi 0, %s119
      %s121 = sphi 0, %s119
      %s122 = sphi 0, %s121
      %s136 = sphi 0, %s122
      %s140 = sphi 0, %s140
      %s142 = sphi 0, %s140
      %s143 = sphi 0, %s142
      %s157 = sphi 0, %s143
      %s161 = sphi 0, %s161
      %s163 = sphi 0, %s161
      %s164 = sphi 0, %s163
      %s178 = sphi 0, %s164
      %s182 = sphi 0, %s182
      %s184 = sphi 0, %s182
      %s185 = sphi 0, %s184
      %s199 = sphi 0, %s185
      %s203 = sphi 0, %s203
      %s205 = sphi 0, %s203
      %s206 = sphi 0, %s205
      %s220 = sphi 0, %s206
      %s224 = sphi 0, %s224
      %s226 = sphi 0, %s224
      %s227 = sphi 0, %s226
      %s241 = sphi 0, %s227
      %s245 = sphi 0, %s245
      %s247 = sphi 0, %s245
      %s248 = sphi 0, %s247
      %s262 = sphi 0, %s248
      %s266 = sphi 0, %s266
      %s268 = sphi 0, %s266
      %s269 = sphi 0, %s268
      %s283 = sphi 0, %s269
      %s287 = sphi 0, %s287
      %s289 = sphi 0, %s287
      %s290 = sphi 0, %s289
      %s304 = sphi 0, %s290
      %s308 = sphi 0, %s308
      %s310 = sphi 0, %s308
      %s311 = sphi 0, %s310
      %s325 = sphi 0, %s311
      %s329 = sphi 0, %s329
      %s331 = sphi 0, %s329
      %s332 = sphi 0, %s331
      %s346 = sphi 0, %s332
      %s350 = sphi 0, %s350
      %s352 = sphi 0, %s350
      %s353 = sphi 0, %s352
      %s367 = sphi 0, %s353
      %s371 = sphi 0, %s371
      %s373 = sphi 0, %s371
      %s374 = sphi 0, %s373
      %s388 = sphi 0, %s374
      %s392 = sphi 0, %s392
      %s394 = sphi 0, %s392
      %s395 = sphi 0, %s394
      %s409 = sphi 0, %s395
      %s413 = sphi 0, %s413
      %s415 = sphi 0, %s413
      %s416 = sphi 0, %s415
      %s430 = sphi 0, %s416
      %s434 = sphi 0, %s434
      %s436 = sphi 0, %s434
      %s437 = sphi 0, %s436
      %s451 = sphi 0, %s437
      %s455 = sphi 0, %s455
      %s457 = sphi 0, %s455
      %s458 = sphi 0, %s457
      %s472 = sphi 0, %s458
      %s478 = sphi 0, %s480
      %s481 = sphi 0, %s478
      %s482 = sphi 0, %s481
      %s498 = sphi 0, %s482
      %s504 = sphi 0, %s506
      %s507 = sphi 0, %s504
      %s508 = sphi 0, %s507
      %s524 = sphi 0, %s508
    $region4: #{tpu_custom_call.1} parent=1 // loop_header_branch
      %41 = sbr.rel (%p39) target = $region8
    $region5: #{tpu_custom_call.1} parent=1 // loop_body
      %s43 = ssub.s32 %s38, 1
      %s44 = ssub.s32 %s38, 2
      %s45 = sadd.s32 %s38, 1
      %s46 = ssub.s32 %s38, %s45
      %p47 = scmp.eq.s32.totalorder %s46, 0
      %s49 = sadd.s32 %s48, 1
      %s50 = scalar_select %p47, %s48, %s49
      %p53 = pneg %p47
      %p54 = scmp.eq.s32.totalorder %s38, 1
      %p55 = por %p53, %p54
      %p56 = scmp.ne.s32.totalorder %s48, %s51
      %p57 = scmp.eq.s32.totalorder %s38, 0
      %p58 = por %p56, %p57
      %p59 = scmp.ne.s32.totalorder %s48, %s51
      %p60 = scmp.eq.s32.totalorder %s43, 1
      %p61 = por %p59, %p60
      %p62 = scmp.ne.s32.totalorder %s51, %s52
      %p63 = scmp.eq.s32.totalorder %s43, 0
      %p64 = por %p62, %p63
      %p65 = scmp.ne.s32.totalorder %s51, %s52
      %p66 = scmp.eq.s32.totalorder %s44, 1
      %p67 = por %p65, %p66
      %p69 = scmp.ne.s32.totalorder %s52, %s68
      %p70 = scmp.eq.s32.totalorder %s44, 0
      %p71 = por %p69, %p70
      %s72 = ssub.s32 %s38, %s45
      %p73 = scmp.eq.s32.totalorder %s72, 0
      %s75 = sadd.s32 %s74, 1
      %s76 = scalar_select %p73, %s74, %s75
      %p79 = pneg %p73
      %p80 = scmp.eq.s32.totalorder %s38, 1
      %p81 = por %p79, %p80
      %p82 = scmp.ne.s32.totalorder %s74, %s77
      %p83 = scmp.eq.s32.totalorder %s38, 0
      %p84 = por %p82, %p83
      %p85 = scmp.ne.s32.totalorder %s74, %s77
      %p86 = scmp.eq.s32.totalorder %s43, 1
      %p87 = por %p85, %p86
      %p88 = scmp.ne.s32.totalorder %s77, %s78
      %p89 = scmp.eq.s32.totalorder %s43, 0
      %p90 = por %p88, %p89
      %p91 = scmp.ne.s32.totalorder %s77, %s78
      %p92 = scmp.eq.s32.totalorder %s44, 1
      %p93 = por %p91, %p92
      %p95 = scmp.ne.s32.totalorder %s78, %s94
      %p96 = scmp.eq.s32.totalorder %s44, 0
      %p97 = por %p95, %p96
      %s99 = sadd.s32 %s98, 1
      %p102 = scmp.eq.s32.totalorder %s38, 1
      %p103 = scmp.ne.s32.totalorder %s98, %s100
      %p104 = scmp.eq.s32.totalorder %s38, 0
      %p105 = por %p103, %p104
      %p106 = scmp.ne.s32.totalorder %s98, %s100
      %p107 = scmp.eq.s32.totalorder %s43, 1
      %p108 = por %p106, %p107
      %p109 = scmp.ne.s32.totalorder %s100, %s101
      %p110 = scmp.eq.s32.totalorder %s43, 0
      %p111 = por %p109, %p110
      %p112 = scmp.ne.s32.totalorder %s100, %s101
      %p113 = scmp.eq.s32.totalorder %s44, 1
      %p114 = por %p112, %p113
      %p116 = scmp.ne.s32.totalorder %s101, %s115
      %p117 = scmp.eq.s32.totalorder %s44, 0
      %p118 = por %p116, %p117
      %s120 = sadd.s32 %s119, 1
      %p123 = scmp.eq.s32.totalorder %s38, 1
      %p124 = scmp.ne.s32.totalorder %s119, %s121
      %p125 = scmp.eq.s32.totalorder %s38, 0
      %p126 = por %p124, %p125
      %p127 = scmp.ne.s32.totalorder %s119, %s121
      %p128 = scmp.eq.s32.totalorder %s43, 1
      %p129 = por %p127, %p128
      %p130 = scmp.ne.s32.totalorder %s121, %s122
      %p131 = scmp.eq.s32.totalorder %s43, 0
      %p132 = por %p130, %p131
      %p133 = scmp.ne.s32.totalorder %s121, %s122
      %p134 = scmp.eq.s32.totalorder %s44, 1
      %p135 = por %p133, %p134
      %p137 = scmp.ne.s32.totalorder %s122, %s136
      %p138 = scmp.eq.s32.totalorder %s44, 0
      %p139 = por %p137, %p138
      %s141 = sadd.s32 %s140, 1
      %p144 = scmp.eq.s32.totalorder %s38, 1
      %p145 = scmp.ne.s32.totalorder %s140, %s142
      %p146 = scmp.eq.s32.totalorder %s38, 0
      %p147 = por %p145, %p146
      %p148 = scmp.ne.s32.totalorder %s140, %s142
      %p149 = scmp.eq.s32.totalorder %s43, 1
      %p150 = por %p148, %p149
      %p151 = scmp.ne.s32.totalorder %s142, %s143
      %p152 = scmp.eq.s32.totalorder %s43, 0
      %p153 = por %p151, %p152
      %p154 = scmp.ne.s32.totalorder %s142, %s143
      %p155 = scmp.eq.s32.totalorder %s44, 1
      %p156 = por %p154, %p155
      %p158 = scmp.ne.s32.totalorder %s143, %s157
      %p159 = scmp.eq.s32.totalorder %s44, 0
      %p160 = por %p158, %p159
      %s162 = sadd.s32 %s161, 1
      %p165 = scmp.eq.s32.totalorder %s38, 1
      %p166 = scmp.ne.s32.totalorder %s161, %s163
      %p167 = scmp.eq.s32.totalorder %s38, 0
      %p168 = por %p166, %p167
      %p169 = scmp.ne.s32.totalorder %s161, %s163
      %p170 = scmp.eq.s32.totalorder %s43, 1
      %p171 = por %p169, %p170
      %p172 = scmp.ne.s32.totalorder %s163, %s164
      %p173 = scmp.eq.s32.totalorder %s43, 0
      %p174 = por %p172, %p173
      %p175 = scmp.ne.s32.totalorder %s163, %s164
      %p176 = scmp.eq.s32.totalorder %s44, 1
      %p177 = por %p175, %p176
      %p179 = scmp.ne.s32.totalorder %s164, %s178
      %p180 = scmp.eq.s32.totalorder %s44, 0
      %p181 = por %p179, %p180
      %s183 = sadd.s32 %s182, 1
      %p186 = scmp.eq.s32.totalorder %s38, 1
      %p187 = scmp.ne.s32.totalorder %s182, %s184
      %p188 = scmp.eq.s32.totalorder %s38, 0
      %p189 = por %p187, %p188
      %p190 = scmp.ne.s32.totalorder %s182, %s184
      %p191 = scmp.eq.s32.totalorder %s43, 1
      %p192 = por %p190, %p191
      %p193 = scmp.ne.s32.totalorder %s184, %s185
      %p194 = scmp.eq.s32.totalorder %s43, 0
      %p195 = por %p193, %p194
      %p196 = scmp.ne.s32.totalorder %s184, %s185
      %p197 = scmp.eq.s32.totalorder %s44, 1
      %p198 = por %p196, %p197
      %p200 = scmp.ne.s32.totalorder %s185, %s199
      %p201 = scmp.eq.s32.totalorder %s44, 0
      %p202 = por %p200, %p201
      %s204 = sadd.s32 %s203, 1
      %p207 = scmp.eq.s32.totalorder %s38, 1
      %p208 = scmp.ne.s32.totalorder %s203, %s205
      %p209 = scmp.eq.s32.totalorder %s38, 0
      %p210 = por %p208, %p209
      %p211 = scmp.ne.s32.totalorder %s203, %s205
      %p212 = scmp.eq.s32.totalorder %s43, 1
      %p213 = por %p211, %p212
      %p214 = scmp.ne.s32.totalorder %s205, %s206
      %p215 = scmp.eq.s32.totalorder %s43, 0
      %p216 = por %p214, %p215
      %p217 = scmp.ne.s32.totalorder %s205, %s206
      %p218 = scmp.eq.s32.totalorder %s44, 1
      %p219 = por %p217, %p218
      %p221 = scmp.ne.s32.totalorder %s206, %s220
      %p222 = scmp.eq.s32.totalorder %s44, 0
      %p223 = por %p221, %p222
      %s225 = sadd.s32 %s224, 1
      %p228 = scmp.eq.s32.totalorder %s38, 1
      %p229 = scmp.ne.s32.totalorder %s224, %s226
      %p230 = scmp.eq.s32.totalorder %s38, 0
      %p231 = por %p229, %p230
      %p232 = scmp.ne.s32.totalorder %s224, %s226
      %p233 = scmp.eq.s32.totalorder %s43, 1
      %p234 = por %p232, %p233
      %p235 = scmp.ne.s32.totalorder %s226, %s227
      %p236 = scmp.eq.s32.totalorder %s43, 0
      %p237 = por %p235, %p236
      %p238 = scmp.ne.s32.totalorder %s226, %s227
      %p239 = scmp.eq.s32.totalorder %s44, 1
      %p240 = por %p238, %p239
      %p242 = scmp.ne.s32.totalorder %s227, %s241
      %p243 = scmp.eq.s32.totalorder %s44, 0
      %p244 = por %p242, %p243
      %s246 = sadd.s32 %s245, 1
      %p249 = scmp.eq.s32.totalorder %s38, 1
      %p250 = scmp.ne.s32.totalorder %s245, %s247
      %p251 = scmp.eq.s32.totalorder %s38, 0
      %p252 = por %p250, %p251
      %p253 = scmp.ne.s32.totalorder %s245, %s247
      %p254 = scmp.eq.s32.totalorder %s43, 1
      %p255 = por %p253, %p254
      %p256 = scmp.ne.s32.totalorder %s247, %s248
      %p257 = scmp.eq.s32.totalorder %s43, 0
      %p258 = por %p256, %p257
      %p259 = scmp.ne.s32.totalorder %s247, %s248
      %p260 = scmp.eq.s32.totalorder %s44, 1
      %p261 = por %p259, %p260
      %p263 = scmp.ne.s32.totalorder %s248, %s262
      %p264 = scmp.eq.s32.totalorder %s44, 0
      %p265 = por %p263, %p264
      %s267 = sadd.s32 %s266, 1
      %p270 = scmp.eq.s32.totalorder %s38, 1
      %p271 = scmp.ne.s32.totalorder %s266, %s268
      %p272 = scmp.eq.s32.totalorder %s38, 0
      %p273 = por %p271, %p272
      %p274 = scmp.ne.s32.totalorder %s266, %s268
      %p275 = scmp.eq.s32.totalorder %s43, 1
      %p276 = por %p274, %p275
      %p277 = scmp.ne.s32.totalorder %s268, %s269
      %p278 = scmp.eq.s32.totalorder %s43, 0
      %p279 = por %p277, %p278
      %p280 = scmp.ne.s32.totalorder %s268, %s269
      %p281 = scmp.eq.s32.totalorder %s44, 1
      %p282 = por %p280, %p281
      %p284 = scmp.ne.s32.totalorder %s269, %s283
      %p285 = scmp.eq.s32.totalorder %s44, 0
      %p286 = por %p284, %p285
      %s288 = sadd.s32 %s287, 1
      %p291 = scmp.eq.s32.totalorder %s38, 1
      %p292 = scmp.ne.s32.totalorder %s287, %s289
      %p293 = scmp.eq.s32.totalorder %s38, 0
      %p294 = por %p292, %p293
      %p295 = scmp.ne.s32.totalorder %s287, %s289
      %p296 = scmp.eq.s32.totalorder %s43, 1
      %p297 = por %p295, %p296
      %p298 = scmp.ne.s32.totalorder %s289, %s290
      %p299 = scmp.eq.s32.totalorder %s43, 0
      %p300 = por %p298, %p299
      %p301 = scmp.ne.s32.totalorder %s289, %s290
      %p302 = scmp.eq.s32.totalorder %s44, 1
      %p303 = por %p301, %p302
      %p305 = scmp.ne.s32.totalorder %s290, %s304
      %p306 = scmp.eq.s32.totalorder %s44, 0
      %p307 = por %p305, %p306
      %s309 = sadd.s32 %s308, 1
      %p312 = scmp.eq.s32.totalorder %s38, 1
      %p313 = scmp.ne.s32.totalorder %s308, %s310
      %p314 = scmp.eq.s32.totalorder %s38, 0
      %p315 = por %p313, %p314
      %p316 = scmp.ne.s32.totalorder %s308, %s310
      %p317 = scmp.eq.s32.totalorder %s43, 1
      %p318 = por %p316, %p317
      %p319 = scmp.ne.s32.totalorder %s310, %s311
      %p320 = scmp.eq.s32.totalorder %s43, 0
      %p321 = por %p319, %p320
      %p322 = scmp.ne.s32.totalorder %s310, %s311
      %p323 = scmp.eq.s32.totalorder %s44, 1
      %p324 = por %p322, %p323
      %p326 = scmp.ne.s32.totalorder %s311, %s325
      %p327 = scmp.eq.s32.totalorder %s44, 0
      %p328 = por %p326, %p327
      %s330 = sadd.s32 %s329, 1
      %p333 = scmp.eq.s32.totalorder %s38, 1
      %p334 = scmp.ne.s32.totalorder %s329, %s331
      %p335 = scmp.eq.s32.totalorder %s38, 0
      %p336 = por %p334, %p335
      %p337 = scmp.ne.s32.totalorder %s329, %s331
      %p338 = scmp.eq.s32.totalorder %s43, 1
      %p339 = por %p337, %p338
      %p340 = scmp.ne.s32.totalorder %s331, %s332
      %p341 = scmp.eq.s32.totalorder %s43, 0
      %p342 = por %p340, %p341
      %p343 = scmp.ne.s32.totalorder %s331, %s332
      %p344 = scmp.eq.s32.totalorder %s44, 1
      %p345 = por %p343, %p344
      %p347 = scmp.ne.s32.totalorder %s332, %s346
      %p348 = scmp.eq.s32.totalorder %s44, 0
      %p349 = por %p347, %p348
      %s351 = sadd.s32 %s350, 1
      %p354 = scmp.eq.s32.totalorder %s38, 1
      %p355 = scmp.ne.s32.totalorder %s350, %s352
      %p356 = scmp.eq.s32.totalorder %s38, 0
      %p357 = por %p355, %p356
      %p358 = scmp.ne.s32.totalorder %s350, %s352
      %p359 = scmp.eq.s32.totalorder %s43, 1
      %p360 = por %p358, %p359
      %p361 = scmp.ne.s32.totalorder %s352, %s353
      %p362 = scmp.eq.s32.totalorder %s43, 0
      %p363 = por %p361, %p362
      %p364 = scmp.ne.s32.totalorder %s352, %s353
      %p365 = scmp.eq.s32.totalorder %s44, 1
      %p366 = por %p364, %p365
      %p368 = scmp.ne.s32.totalorder %s353, %s367
      %p369 = scmp.eq.s32.totalorder %s44, 0
      %p370 = por %p368, %p369
      %s372 = sadd.s32 %s371, 1
      %p375 = scmp.eq.s32.totalorder %s38, 1
      %p376 = scmp.ne.s32.totalorder %s371, %s373
      %p377 = scmp.eq.s32.totalorder %s38, 0
      %p378 = por %p376, %p377
      %p379 = scmp.ne.s32.totalorder %s371, %s373
      %p380 = scmp.eq.s32.totalorder %s43, 1
      %p381 = por %p379, %p380
      %p382 = scmp.ne.s32.totalorder %s373, %s374
      %p383 = scmp.eq.s32.totalorder %s43, 0
      %p384 = por %p382, %p383
      %p385 = scmp.ne.s32.totalorder %s373, %s374
      %p386 = scmp.eq.s32.totalorder %s44, 1
      %p387 = por %p385, %p386
      %p389 = scmp.ne.s32.totalorder %s374, %s388
      %p390 = scmp.eq.s32.totalorder %s44, 0
      %p391 = por %p389, %p390
      %s393 = sadd.s32 %s392, 1
      %p396 = scmp.eq.s32.totalorder %s38, 1
      %p397 = scmp.ne.s32.totalorder %s392, %s394
      %p398 = scmp.eq.s32.totalorder %s38, 0
      %p399 = por %p397, %p398
      %p400 = scmp.ne.s32.totalorder %s392, %s394
      %p401 = scmp.eq.s32.totalorder %s43, 1
      %p402 = por %p400, %p401
      %p403 = scmp.ne.s32.totalorder %s394, %s395
      %p404 = scmp.eq.s32.totalorder %s43, 0
      %p405 = por %p403, %p404
      %p406 = scmp.ne.s32.totalorder %s394, %s395
      %p407 = scmp.eq.s32.totalorder %s44, 1
      %p408 = por %p406, %p407
      %p410 = scmp.ne.s32.totalorder %s395, %s409
      %p411 = scmp.eq.s32.totalorder %s44, 0
      %p412 = por %p410, %p411
      %s414 = sadd.s32 %s413, 1
      %p417 = scmp.eq.s32.totalorder %s38, 1
      %p418 = scmp.ne.s32.totalorder %s413, %s415
      %p419 = scmp.eq.s32.totalorder %s38, 0
      %p420 = por %p418, %p419
      %p421 = scmp.ne.s32.totalorder %s413, %s415
      %p422 = scmp.eq.s32.totalorder %s43, 1
      %p423 = por %p421, %p422
      %p424 = scmp.ne.s32.totalorder %s415, %s416
      %p425 = scmp.eq.s32.totalorder %s43, 0
      %p426 = por %p424, %p425
      %p427 = scmp.ne.s32.totalorder %s415, %s416
      %p428 = scmp.eq.s32.totalorder %s44, 1
      %p429 = por %p427, %p428
      %p431 = scmp.ne.s32.totalorder %s416, %s430
      %p432 = scmp.eq.s32.totalorder %s44, 0
      %p433 = por %p431, %p432
      %s435 = sadd.s32 %s434, 1
      %p438 = scmp.eq.s32.totalorder %s38, 1
      %p439 = scmp.ne.s32.totalorder %s434, %s436
      %p440 = scmp.eq.s32.totalorder %s38, 0
      %p441 = por %p439, %p440
      %p442 = scmp.ne.s32.totalorder %s434, %s436
      %p443 = scmp.eq.s32.totalorder %s43, 1
      %p444 = por %p442, %p443
      %p445 = scmp.ne.s32.totalorder %s436, %s437
      %p446 = scmp.eq.s32.totalorder %s43, 0
      %p447 = por %p445, %p446
      %p448 = scmp.ne.s32.totalorder %s436, %s437
      %p449 = scmp.eq.s32.totalorder %s44, 1
      %p450 = por %p448, %p449
      %p452 = scmp.ne.s32.totalorder %s437, %s451
      %p453 = scmp.eq.s32.totalorder %s44, 0
      %p454 = por %p452, %p453
      %s456 = sadd.s32 %s455, 1
      %p459 = scmp.eq.s32.totalorder %s38, 1
      %p460 = scmp.ne.s32.totalorder %s455, %s457
      %p461 = scmp.eq.s32.totalorder %s38, 0
      %p462 = por %p460, %p461
      %p463 = scmp.ne.s32.totalorder %s455, %s457
      %p464 = scmp.eq.s32.totalorder %s43, 1
      %p465 = por %p463, %p464
      %p466 = scmp.ne.s32.totalorder %s457, %s458
      %p467 = scmp.eq.s32.totalorder %s43, 0
      %p468 = por %p466, %p467
      %p469 = scmp.ne.s32.totalorder %s457, %s458
      %p470 = scmp.eq.s32.totalorder %s44, 1
      %p471 = por %p469, %p470
      %p473 = scmp.ne.s32.totalorder %s458, %s472
      %p474 = scmp.eq.s32.totalorder %s44, 0
      %p475 = por %p473, %p474
      %s476 = ssub.s32 %s38, %s45
      %p477 = scmp.eq.s32.totalorder %s476, 0
      %s479 = sadd.s32 %s478, 1
      %s480 = scalar_select %p477, %s478, %s479
      %p483 = pneg %p477
      %p484 = scmp.eq.s32.totalorder %s38, 1
      %p485 = por %p483, %p484
      %p486 = scmp.ne.s32.totalorder %s478, %s481
      %p487 = scmp.eq.s32.totalorder %s38, 0
      %p488 = por %p486, %p487
      %p489 = scmp.ne.s32.totalorder %s478, %s481
      %p490 = scmp.eq.s32.totalorder %s43, 1
      %p491 = por %p489, %p490
      %p492 = scmp.ne.s32.totalorder %s481, %s482
      %p493 = scmp.eq.s32.totalorder %s43, 0
      %p494 = por %p492, %p493
      %p495 = scmp.ne.s32.totalorder %s481, %s482
      %p496 = scmp.eq.s32.totalorder %s44, 1
      %p497 = por %p495, %p496
      %p499 = scmp.ne.s32.totalorder %s482, %s498
      %p500 = scmp.eq.s32.totalorder %s44, 0
      %p501 = por %p499, %p500
      %s502 = ssub.s32 %s38, %s45
      %p503 = scmp.eq.s32.totalorder %s502, 0
      %s505 = sadd.s32 %s504, 1
      %s506 = scalar_select %p503, %s504, %s505
      %p509 = pneg %p503
      %p510 = scmp.eq.s32.totalorder %s38, 1
      %p511 = por %p509, %p510
      %p512 = scmp.ne.s32.totalorder %s504, %s507
      %p513 = scmp.eq.s32.totalorder %s38, 0
      %p514 = por %p512, %p513
      %p515 = scmp.ne.s32.totalorder %s504, %s507
      %p516 = scmp.eq.s32.totalorder %s43, 1
      %p517 = por %p515, %p516
      %p518 = scmp.ne.s32.totalorder %s507, %s508
      %p519 = scmp.eq.s32.totalorder %s43, 0
      %p520 = por %p518, %p519
      %p521 = scmp.ne.s32.totalorder %s507, %s508
      %p522 = scmp.eq.s32.totalorder %s44, 1
      %p523 = por %p521, %p522
      %p525 = scmp.ne.s32.totalorder %s508, %s524
      %p526 = scmp.eq.s32.totalorder %s44, 0
      %p527 = por %p525, %p526
      %p528 = scmp.le.s32.totalorder 1, %s38
      %p529 = scmp.lt.s32.totalorder %s38, 3
      %p530 = pnand %p528, %p529
      %p531 = pneg %p530
      // Predicated region
      $region9: #{tpu_custom_call.1} parent=5 // pred_check
        _
      $region10: #{tpu_custom_call.1} parent=5 // pred_check_branch
        %533 = sbr.rel (%p530) target = $region12
      $region11: #{tpu_custom_call.1} parent=5 // pred_region
        %s534 = ssub.s32 %s38, 1
        // Predicated region
        $region13: #{tpu_custom_call.1} parent=11 // pred_check
          %p535 = pneg %p111
        $region14: #{tpu_custom_call.1} parent=11 // pred_check_branch
          %537 = sbr.rel (%p535) target = $region16
        $region15: #{tpu_custom_call.1} parent=11 // pred_region
          %s539 = ssub.s32 8192, 8192
          %540 = vsyncadd [#allocation3], %s539
          %s541 = sshll.u32 [#allocation2], 4
          %s542 = int_to_ptr.vmem [resolvable:$true] %s541
          %547 = dma.hbm_to_vmem [thread:$0]  %s2, 8192, %s542, [#allocation3], 512, 512, 32
        $region16: #{tpu_custom_call.1} parent=11 // pred_fallthru
          _
        // Predicated region
        $region17: #{tpu_custom_call.1} parent=11 // pred_check
          %p548 = pneg %p132
        $region18: #{tpu_custom_call.1} parent=11 // pred_check_branch
          %550 = sbr.rel (%p548) target = $region20
        $region19: #{tpu_custom_call.1} parent=11 // pred_region
          _
        $region20: #{tpu_custom_call.1} parent=11 // pred_fallthru
          _
        // Predicated region
        $region21: #{tpu_custom_call.1} parent=11 // pred_check
          %p551 = pneg %p153
        $region22: #{tpu_custom_call.1} parent=11 // pred_check_branch
          %553 = sbr.rel (%p551) target = $region24
        $region23: #{tpu_custom_call.1} parent=11 // pred_region
          %s555 = ssub.s32 16384, 16384
          %556 = vsyncadd [#allocation6], %s555
          %s557 = sshll.u32 [#allocation5], 4
          %s558 = int_to_ptr.vmem [resolvable:$true] %s557
          %563 = dma.hbm_to_vmem [thread:$0]  %s4, 16384, %s558, [#allocation6], 256, 256, 16
        $region24: #{tpu_custom_call.1} parent=11 // pred_fallthru
          _
        // Predicated region
        $region25: #{tpu_custom_call.1} parent=11 // pred_check
          %p564 = pneg %p174
        $region26: #{tpu_custom_call.1} parent=11 // pred_check_branch
          %566 = sbr.rel (%p564) target = $region28
        $region27: #{tpu_custom_call.1} parent=11 // pred_region
          _
        $region28: #{tpu_custom_call.1} parent=11 // pred_fallthru
          _
        // Predicated region
        $region29: #{tpu_custom_call.1} parent=11 // pred_check
          %p567 = pneg %p195
        $region30: #{tpu_custom_call.1} parent=11 // pred_check_branch
          %569 = sbr.rel (%p567) target = $region32
        $region31: #{tpu_custom_call.1} parent=11 // pred_region
          %s571 = ssub.s32 4096, 4096
          %572 = vsyncadd [#allocation6], %s571
          %s573 = sshll.u32 [#allocation7], 4
          %s574 = int_to_ptr.vmem [resolvable:$true] %s573
          %579 = dma.hbm_to_vmem [thread:$0]  %s6, 4096, %s574, [#allocation6], 128, 128, 8
        $region32: #{tpu_custom_call.1} parent=11 // pred_fallthru
          _
        // Predicated region
        $region33: #{tpu_custom_call.1} parent=11 // pred_check
          %p580 = pneg %p216
        $region34: #{tpu_custom_call.1} parent=11 // pred_check_branch
          %582 = sbr.rel (%p580) target = $region36
        $region35: #{tpu_custom_call.1} parent=11 // pred_region
          _
        $region36: #{tpu_custom_call.1} parent=11 // pred_fallthru
          _
        // Predicated region
        $region37: #{tpu_custom_call.1} parent=11 // pred_check
          %p583 = pneg %p237
        $region38: #{tpu_custom_call.1} parent=11 // pred_check_branch
          %585 = sbr.rel (%p583) target = $region40
        $region39: #{tpu_custom_call.1} parent=11 // pred_region
          _
        $region40: #{tpu_custom_call.1} parent=11 // pred_fallthru
          _
        // Predicated region
        $region41: #{tpu_custom_call.1} parent=11 // pred_check
          %p586 = pneg %p258
        $region42: #{tpu_custom_call.1} parent=11 // pred_check_branch
          %588 = sbr.rel (%p586) target = $region44
        $region43: #{tpu_custom_call.1} parent=11 // pred_region
          _
        $region44: #{tpu_custom_call.1} parent=11 // pred_fallthru
          _
        // Predicated region
        $region45: #{tpu_custom_call.1} parent=11 // pred_check
          %p589 = pneg %p279
        $region46: #{tpu_custom_call.1} parent=11 // pred_check_branch
          %591 = sbr.rel (%p589) target = $region48
        $region47: #{tpu_custom_call.1} parent=11 // pred_region
          _
        $region48: #{tpu_custom_call.1} parent=11 // pred_fallthru
          _
        // Predicated region
        $region49: #{tpu_custom_call.1} parent=11 // pred_check
          %p592 = pneg %p300
        $region50: #{tpu_custom_call.1} parent=11 // pred_check_branch
          %594 = sbr.rel (%p592) target = $region52
        $region51: #{tpu_custom_call.1} parent=11 // pred_region
          _
        $region52: #{tpu_custom_call.1} parent=11 // pred_fallthru
          _
        // Predicated region
        $region53: #{tpu_custom_call.1} parent=11 // pred_check
          %p595 = pneg %p321
        $region54: #{tpu_custom_call.1} parent=11 // pred_check_branch
          %597 = sbr.rel (%p595) target = $region56
        $region55: #{tpu_custom_call.1} parent=11 // pred_region
          _
        $region56: #{tpu_custom_call.1} parent=11 // pred_fallthru
          _
        // Predicated region
        $region57: #{tpu_custom_call.1} parent=11 // pred_check
          %p598 = pneg %p342
        $region58: #{tpu_custom_call.1} parent=11 // pred_check_branch
          %600 = sbr.rel (%p598) target = $region60
        $region59: #{tpu_custom_call.1} parent=11 // pred_region
          _
        $region60: #{tpu_custom_call.1} parent=11 // pred_fallthru
          _
        // Predicated region
        $region61: #{tpu_custom_call.1} parent=11 // pred_check
          %p601 = pneg %p363
        $region62: #{tpu_custom_call.1} parent=11 // pred_check_branch
          %603 = sbr.rel (%p601) target = $region64
        $region63: #{tpu_custom_call.1} parent=11 // pred_region
          %s605 = ssub.s32 4096, 4096
          %606 = vsyncadd [#allocation9], %s605
          %s607 = sshll.u32 [#allocation8], 4
          %s608 = int_to_ptr.vmem [resolvable:$true] %s607
          %613 = dma.hbm_to_vmem [thread:$0]  %s14, 4096, %s608, [#allocation9], 256, 256, 16
        $region64: #{tpu_custom_call.1} parent=11 // pred_fallthru
          _
        // Predicated region
        $region65: #{tpu_custom_call.1} parent=11 // pred_check
          %p614 = pneg %p384
        $region66: #{tpu_custom_call.1} parent=11 // pred_check_branch
          %616 = sbr.rel (%p614) target = $region68
        $region67: #{tpu_custom_call.1} parent=11 // pred_region
          _
        $region68: #{tpu_custom_call.1} parent=11 // pred_fallthru
          _
        // Predicated region
        $region69: #{tpu_custom_call.1} parent=11 // pred_check
          %p617 = pneg %p405
        $region70: #{tpu_custom_call.1} parent=11 // pred_check_branch
          %619 = sbr.rel (%p617) target = $region72
        $region71: #{tpu_custom_call.1} parent=11 // pred_region
          %s621 = ssub.s32 16384, 16384
          %622 = vsyncadd [#allocation9], %s621
          %s623 = sshll.u32 [#allocation10], 4
          %s624 = int_to_ptr.vmem [resolvable:$true] %s623
          %629 = dma.hbm_to_vmem [thread:$0]  %s16, 16384, %s624, [#allocation9], 512, 512, 32
        $region72: #{tpu_custom_call.1} parent=11 // pred_fallthru
          _
        // Predicated region
        $region73: #{tpu_custom_call.1} parent=11 // pred_check
          %p630 = pneg %p426
        $region74: #{tpu_custom_call.1} parent=11 // pred_check_branch
          %632 = sbr.rel (%p630) target = $region76
        $region75: #{tpu_custom_call.1} parent=11 // pred_region
          _
        $region76: #{tpu_custom_call.1} parent=11 // pred_fallthru
          _
        // Predicated region
        $region77: #{tpu_custom_call.1} parent=11 // pred_check
          %p633 = pneg %p447
        $region78: #{tpu_custom_call.1} parent=11 // pred_check_branch
          %635 = sbr.rel (%p633) target = $region80
        $region79: #{tpu_custom_call.1} parent=11 // pred_region
          %s637 = ssub.s32 8192, 8192
          %638 = vsyncadd [#allocation12], %s637
          %s639 = sshll.u32 [#allocation11], 4
          %s640 = int_to_ptr.vmem [resolvable:$true] %s639
          %645 = dma.hbm_to_vmem [thread:$0]  %s18, 8192, %s640, [#allocation12], 128, 128, 8
        $region80: #{tpu_custom_call.1} parent=11 // pred_fallthru
          _
        // Predicated region
        $region81: #{tpu_custom_call.1} parent=11 // pred_check
          %p646 = pneg %p468
        $region82: #{tpu_custom_call.1} parent=11 // pred_check_branch
          %648 = sbr.rel (%p646) target = $region84
        $region83: #{tpu_custom_call.1} parent=11 // pred_region
          _
        $region84: #{tpu_custom_call.1} parent=11 // pred_fallthru
          _
      $region12: #{tpu_custom_call.1} parent=5 // pred_fallthru
        _
      %p649 = scmp.lt.s32.totalorder %s38, 2
      // Predicated region
      $region85: #{tpu_custom_call.1} parent=5 // pred_check
        %p650 = pneg %p649
      $region86: #{tpu_custom_call.1} parent=5 // pred_check_branch
        %652 = sbr.rel (%p650) target = $region88
      $region87: #{tpu_custom_call.1} parent=5 // pred_region
        // Predicated region
        $region89: #{tpu_custom_call.1} parent=87 // pred_check
          %p653 = pneg %p58
        $region90: #{tpu_custom_call.1} parent=87 // pred_check_branch
          %655 = sbr.rel (%p653) target = $region92
        $region91: #{tpu_custom_call.1} parent=87 // pred_region
          %p656 = scmp.lt.s32.totalorder %s38, 1
          %s657 = scalar_select %p656, %s38, 1
          %s658 = smul.addr %s657, 8
          %s659 = scalar_lea.vmem %s0, %s658
        $region92: #{tpu_custom_call.1} parent=87 // pred_fallthru
          _
        // Predicated region
        $region93: #{tpu_custom_call.1} parent=87 // pred_check
          %p660 = pneg %p84
        $region94: #{tpu_custom_call.1} parent=87 // pred_check_branch
          %662 = sbr.rel (%p660) target = $region96
        $region95: #{tpu_custom_call.1} parent=87 // pred_region
          %p663 = scmp.lt.s32.totalorder %s38, 1
          %s664 = scalar_select %p663, %s38, 1
          %s665 = smul.addr %s664, 8
          %s666 = scalar_lea.vmem %s1, %s665
        $region96: #{tpu_custom_call.1} parent=87 // pred_fallthru
          _
      $region88: #{tpu_custom_call.1} parent=5 // pred_fallthru
        _
      %p667 = scmp.le.s32.totalorder 1, %s38
      %p668 = scmp.lt.s32.totalorder %s38, 3
      %p669 = pnand %p667, %p668
      %p670 = pneg %p669
      // Predicated region
      $region97: #{tpu_custom_call.1} parent=5 // pred_check
        _
      $region98: #{tpu_custom_call.1} parent=5 // pred_check_branch
        %672 = sbr.rel (%p669) target = $region100
      $region99: #{tpu_custom_call.1} parent=5 // pred_region
        %s673 = ssub.s32 %s38, 1
        // Predicated region
        $region101: #{tpu_custom_call.1} parent=99 // pred_check
          %p674 = pneg %p111
        $region102: #{tpu_custom_call.1} parent=99 // pred_check_branch
          %676 = sbr.rel (%p674) target = $region104
        $region103: #{tpu_custom_call.1} parent=99 // pred_region
          %677 = dma.done [#allocation3], 8192
        $region104: #{tpu_custom_call.1} parent=99 // pred_fallthru
          _
        // Predicated region
        $region105: #{tpu_custom_call.1} parent=99 // pred_check
          %p678 = pneg %p153
        $region106: #{tpu_custom_call.1} parent=99 // pred_check_branch
          %680 = sbr.rel (%p678) target = $region108
        $region107: #{tpu_custom_call.1} parent=99 // pred_region
          %681 = dma.done [#allocation6], 16384
        $region108: #{tpu_custom_call.1} parent=99 // pred_fallthru
          _
        // Predicated region
        $region109: #{tpu_custom_call.1} parent=99 // pred_check
          %p682 = pneg %p195
        $region110: #{tpu_custom_call.1} parent=99 // pred_check_branch
          %684 = sbr.rel (%p682) target = $region112
        $region111: #{tpu_custom_call.1} parent=99 // pred_region
          %685 = dma.done [#allocation6], 4096
        $region112: #{tpu_custom_call.1} parent=99 // pred_fallthru
          _
        // Predicated region
        $region113: #{tpu_custom_call.1} parent=99 // pred_check
          %p686 = pneg %p363
        $region114: #{tpu_custom_call.1} parent=99 // pred_check_branch
          %688 = sbr.rel (%p686) target = $region116
        $region115: #{tpu_custom_call.1} parent=99 // pred_region
          %689 = dma.done [#allocation9], 4096
        $region116: #{tpu_custom_call.1} parent=99 // pred_fallthru
          _
        // Predicated region
        $region117: #{tpu_custom_call.1} parent=99 // pred_check
          %p690 = pneg %p405
        $region118: #{tpu_custom_call.1} parent=99 // pred_check_branch
          %692 = sbr.rel (%p690) target = $region120
        $region119: #{tpu_custom_call.1} parent=99 // pred_region
          %693 = dma.done [#allocation9], 16384
        $region120: #{tpu_custom_call.1} parent=99 // pred_fallthru
          _
        // Predicated region
        $region121: #{tpu_custom_call.1} parent=99 // pred_check
          %p694 = pneg %p447
        $region122: #{tpu_custom_call.1} parent=99 // pred_check_branch
          %696 = sbr.rel (%p694) target = $region124
        $region123: #{tpu_custom_call.1} parent=99 // pred_region
          %697 = dma.done [#allocation12], 8192
        $region124: #{tpu_custom_call.1} parent=99 // pred_fallthru
          _
        %p698 = scmp.lt.s32.totalorder %s43, 1
        %s699 = scalar_select %p698, %s43, 1
        %s700 = smul.addr %s699, 8
        %s701 = scalar_lea.vmem %s0, %s700
        %p702 = pneg %p64
        %p703 = pneg %p61
        %p704 = scmp.lt.s32.totalorder %s43, 1
        %s705 = scalar_select %p704, %s43, 1
        %s706 = smul.addr %s705, 8
        %s707 = scalar_lea.vmem %s1, %s706
        %p708 = pneg %p90
        %p709 = pneg %p87
        %p710 = pneg %p111
        %p711 = pneg %p108
        %p712 = pneg %p132
        %p713 = pneg %p129
        %p714 = pneg %p153
        %p715 = pneg %p150
        %p716 = pneg %p174
        %p717 = pneg %p171
        %p718 = pneg %p195
        %p719 = pneg %p192
        %p720 = pneg %p216
        %p721 = pneg %p213
        %p722 = pneg %p237
        %p723 = pneg %p234
        %p724 = pneg %p258
        %p725 = pneg %p255
        %p726 = pneg %p279
        %p727 = pneg %p276
        %p728 = pneg %p300
        %p729 = pneg %p297
        %p730 = pneg %p321
        %p731 = pneg %p318
        %p732 = pneg %p342
        %p733 = pneg %p339
        %p734 = pneg %p363
        %p735 = pneg %p360
        %p736 = pneg %p384
        %p737 = pneg %p381
        %p738 = pneg %p405
        %p739 = pneg %p402
        %p740 = pneg %p426
        %p741 = pneg %p423
        %p742 = pneg %p447
        %p743 = pneg %p444
        %p744 = pneg %p468
        %p745 = pneg %p465
        %p746 = pneg %p494
        %p747 = pneg %p491
        %s748 = sand.u32 %s481, 1
        %s749 = scalar_lea.sflag [#allocation4], %s748
        %s750 = sand.u32 %s481, 1
        %s751 = smul.addr %s750, 8
        %s752 = scalar_lea.vmem [#allocation13], %s751
        %p753 = pneg %p520
        %p754 = pneg %p517
        %s755 = sand.u32 %s507, 1
        %s756 = scalar_lea.sflag [#allocation15], %s755
        %s757 = sand.u32 %s507, 1
        %s758 = smul.addr %s757, 8
        %s759 = scalar_lea.vmem [#allocation14], %s758
        %p760 = scmp.lt.s32.totalorder %s43, 1
        %s761 = scalar_select %p760, %s43, 1
        %s762 = smul.addr %s761, 8
        %s763 = scalar_lea.vmem %s0, %s762
        %p764 = scmp.lt.s32.totalorder %s43, 1
        %s765 = scalar_select %p764, %s43, 1
        %s766 = smul.addr %s765, 8
        %s767 = scalar_lea.vmem %s1, %s766
        %v768 = vld [vmem:[%s763] sm:$0xff]
        %v769 = vld [vmem:[#allocation2] sm:$0xff]
        %v770 = vld [vmem:[#allocation2 + $0x8] sm:$0xff]
        %v771 = vld [vmem:[#allocation2 + $0x10] sm:$0xff]
        %v772 = vld [vmem:[#allocation2 + $0x18] sm:$0xff]
        %v773 = vld [vmem:[#allocation2 + $0x20] sm:$0xff]
        %v774 = vld [vmem:[#allocation2 + $0x28] sm:$0xff]
        %v775 = vld [vmem:[#allocation2 + $0x30] sm:$0xff]
        %v776 = vld [vmem:[#allocation2 + $0x38] sm:$0xff]
        %v777 = vld [vmem:[#allocation2 + $0x40] sm:$0xff]
        %v778 = vld [vmem:[#allocation2 + $0x48] sm:$0xff]
        %v779 = vld [vmem:[#allocation2 + $0x50] sm:$0xff]
        %v780 = vld [vmem:[#allocation2 + $0x58] sm:$0xff]
        %v781 = vld [vmem:[#allocation2 + $0x60] sm:$0xff]
        %v782 = vld [vmem:[#allocation2 + $0x68] sm:$0xff]
        %v783 = vld [vmem:[#allocation2 + $0x70] sm:$0xff]
        %v784 = vld [vmem:[#allocation2 + $0x78] sm:$0xff]
        %v785 = vld [vmem:[#allocation2 + $0x80] sm:$0xff]
        %v786 = vld [vmem:[#allocation2 + $0x88] sm:$0xff]
        %v787 = vld [vmem:[#allocation2 + $0x90] sm:$0xff]
        %v788 = vld [vmem:[#allocation2 + $0x98] sm:$0xff]
        %v789 = vld [vmem:[#allocation2 + $0xa0] sm:$0xff]
        %v790 = vld [vmem:[#allocation2 + $0xa8] sm:$0xff]
        %v791 = vld [vmem:[#allocation2 + $0xb0] sm:$0xff]
        %v792 = vld [vmem:[#allocation2 + $0xb8] sm:$0xff]
        %v793 = vld [vmem:[#allocation2 + $0xc0] sm:$0xff]
        %v794 = vld [vmem:[#allocation2 + $0xc8] sm:$0xff]
        %v795 = vld [vmem:[#allocation2 + $0xd0] sm:$0xff]
        %v796 = vld [vmem:[#allocation2 + $0xd8] sm:$0xff]
        %v797 = vld [vmem:[#allocation2 + $0xe0] sm:$0xff]
        %v798 = vld [vmem:[#allocation2 + $0xe8] sm:$0xff]
        %v799 = vld [vmem:[#allocation2 + $0xf0] sm:$0xff]
        %v800 = vld [vmem:[#allocation2 + $0xf8] sm:$0xff]
        %v801 = vld [vmem:[#allocation2 + $0x100] sm:$0xff]
        %v802 = vld [vmem:[#allocation2 + $0x108] sm:$0xff]
        %v803 = vld [vmem:[#allocation2 + $0x110] sm:$0xff]
        %v804 = vld [vmem:[#allocation2 + $0x118] sm:$0xff]
        %v805 = vld [vmem:[#allocation2 + $0x120] sm:$0xff]
        %v806 = vld [vmem:[#allocation2 + $0x128] sm:$0xff]
        %v807 = vld [vmem:[#allocation2 + $0x130] sm:$0xff]
        %v808 = vld [vmem:[#allocation2 + $0x138] sm:$0xff]
        %v809 = vld [vmem:[#allocation2 + $0x140] sm:$0xff]
        %v810 = vld [vmem:[#allocation2 + $0x148] sm:$0xff]
        %v811 = vld [vmem:[#allocation2 + $0x150] sm:$0xff]
        %v812 = vld [vmem:[#allocation2 + $0x158] sm:$0xff]
        %v813 = vld [vmem:[#allocation2 + $0x160] sm:$0xff]
        %v814 = vld [vmem:[#allocation2 + $0x168] sm:$0xff]
        %v815 = vld [vmem:[#allocation2 + $0x170] sm:$0xff]
        %v816 = vld [vmem:[#allocation2 + $0x178] sm:$0xff]
        %v817 = vld [vmem:[#allocation2 + $0x180] sm:$0xff]
        %v818 = vld [vmem:[#allocation2 + $0x188] sm:$0xff]
        %v819 = vld [vmem:[#allocation2 + $0x190] sm:$0xff]
        %v820 = vld [vmem:[#allocation2 + $0x198] sm:$0xff]
        %v821 = vld [vmem:[#allocation2 + $0x1a0] sm:$0xff]
        %v822 = vld [vmem:[#allocation2 + $0x1a8] sm:$0xff]
        %v823 = vld [vmem:[#allocation2 + $0x1b0] sm:$0xff]
        %v824 = vld [vmem:[#allocation2 + $0x1b8] sm:$0xff]
        %v825 = vld [vmem:[#allocation2 + $0x1c0] sm:$0xff]
        %v826 = vld [vmem:[#allocation2 + $0x1c8] sm:$0xff]
        %v827 = vld [vmem:[#allocation2 + $0x1d0] sm:$0xff]
        %v828 = vld [vmem:[#allocation2 + $0x1d8] sm:$0xff]
        %v829 = vld [vmem:[#allocation2 + $0x1e0] sm:$0xff]
        %v830 = vld [vmem:[#allocation2 + $0x1e8] sm:$0xff]
        %v831 = vld [vmem:[#allocation2 + $0x1f0] sm:$0xff]
        %v832 = vld [vmem:[#allocation2 + $0x1f8] sm:$0xff]
        %v833 = vld [vmem:[%s3] sm:$0xf]
        %v835 = vlaneseq
        %v836 = vshrl.u32 %v835, 7
        %v837 = vsub.s32 0, %v836
        %v838 = vrot.slane %v833, %v837
        %v839 = vlaneseq
        %v840 = vshrl.u32 %v839, 7
        %v841 = vsub.s32 1, %v840
        %v842 = vrot.slane %v833, %v841
        %v843 = vlaneseq
        %v844 = vshrl.u32 %v843, 7
        %v845 = vsub.s32 2, %v844
        %v846 = vrot.slane %v833, %v845
        %v847 = vlaneseq
        %v848 = vshrl.u32 %v847, 7
        %v849 = vsub.s32 3, %v848
        %v850 = vrot.slane %v833, %v849
        %855 = vmatprep.subr.mxu0 %v770
        %856 = vmatpush1.msra.mxu0 %v769
        %857 = vmatprep.subr.mxu0 %v774
        %858 = vmatpush1.msra.mxu0 %v773
        %859 = vmatprep.subr.mxu0 %v778
        %860 = vmatpush1.msra.mxu0 %v777
        %861 = vmatprep.subr.mxu0 %v782
        %862 = vmatpush1.msra.mxu0 %v781
        %863 = vmatprep.subr.mxu0 %v786
        %864 = vmatpush1.msra.mxu0 %v785
        %865 = vmatprep.subr.mxu0 %v790
        %866 = vmatpush1.msra.mxu0 %v789
        %867 = vmatprep.subr.mxu0 %v794
        %868 = vmatpush1.msra.mxu0 %v793
        %869 = vmatprep.subr.mxu0 %v798
        %870 = vmatpush1.msra.mxu0 %v797
        %871 = vmatprep.subr.mxu0 %v802
        %872 = vmatpush1.msra.mxu0 %v801
        %873 = vmatprep.subr.mxu0 %v806
        %874 = vmatpush1.msra.mxu0 %v805
        %875 = vmatprep.subr.mxu0 %v810
        %876 = vmatpush1.msra.mxu0 %v809
        %877 = vmatprep.subr.mxu0 %v814
        %878 = vmatpush1.msra.mxu0 %v813
        %879 = vmatprep.subr.mxu0 %v818
        %880 = vmatpush1.msra.mxu0 %v817
        %881 = vmatprep.subr.mxu0 %v822
        %882 = vmatpush1.msra.mxu0 %v821
        %883 = vmatprep.subr.mxu0 %v826
        %884 = vmatpush1.msra.mxu0 %v825
        %885 = vmatprep.subr.mxu0 %v830
        %886 = vmatpush1.msra.mxu0 %v829
        %887 = vmatprep.subr.mxu0 0.0
        %888 = vmatpush1.msra.mxu0 0.0
        %889 = vmatprep.subr.mxu0 0.0
        %890 = vmatpush1.msra.mxu0 0.0
        %891 = vmatprep.subr.mxu0 0.0
        %892 = vmatpush1.msra.mxu0 0.0
        %893 = vmatprep.subr.mxu0 0.0
        %894 = vmatpush1.msra.mxu0 0.0
        %895 = vmatprep.subr.mxu0 0.0
        %896 = vmatpush1.msra.mxu0 0.0
        %897 = vmatprep.subr.mxu0 0.0
        %898 = vmatpush1.msra.mxu0 0.0
        %899 = vmatprep.subr.mxu0 0.0
        %900 = vmatpush1.msra.mxu0 0.0
        %901 = vmatprep.subr.mxu0 0.0
        %902 = vmatpush1.msra.mxu0 0.0
        %903 = vmatprep.subr.mxu0 0.0
        %904 = vmatpush1.msra.mxu0 0.0
        %905 = vmatprep.subr.mxu0 0.0
        %906 = vmatpush1.msra.mxu0 0.0
        %907 = vmatprep.subr.mxu0 0.0
        %908 = vmatpush1.msra.mxu0 0.0
        %909 = vmatprep.subr.mxu0 0.0
        %910 = vmatpush1.msra.mxu0 0.0
        %911 = vmatprep.subr.mxu0 0.0
        %912 = vmatpush1.msra.mxu0 0.0
        %913 = vmatprep.subr.mxu0 0.0
        %914 = vmatpush1.msra.mxu0 0.0
        %915 = vmatprep.subr.mxu0 0.0
        %916 = vmatpush1.msra.mxu0 0.0
        %917 = vmatprep.subr.mxu0 0.0
        %918 = vmatpush1.msra.mxu0 0.0
        %919 = vmatprep.mubr.f32.mxu0 0.0
        %920 = vmatmul.mubr.f32.gmra.mrb[0].mxu0 %v768
        %v921 = vpop.f32.mrb[0].mxu0
        %v922 = vadd.f32 %v838, %v921
        %v923 = vpop.f32.mrb[0].mxu0
        %v924 = vadd.f32 %v842, %v923
        %925 = vdwg.mxu0
        %926 = vmatprep.subr.mxu0 %v772
        %927 = vmatpush1.msra.mxu0 %v771
        %928 = vmatprep.subr.mxu0 %v776
        %929 = vmatpush1.msra.mxu0 %v775
        %930 = vmatprep.subr.mxu0 %v780
        %931 = vmatpush1.msra.mxu0 %v779
        %932 = vmatprep.subr.mxu0 %v784
        %933 = vmatpush1.msra.mxu0 %v783
        %934 = vmatprep.subr.mxu0 %v788
        %935 = vmatpush1.msra.mxu0 %v787
        %936 = vmatprep.subr.mxu0 %v792
        %937 = vmatpush1.msra.mxu0 %v791
        %938 = vmatprep.subr.mxu0 %v796
        %939 = vmatpush1.msra.mxu0 %v795
        %940 = vmatprep.subr.mxu0 %v800
        %941 = vmatpush1.msra.mxu0 %v799
        %942 = vmatprep.subr.mxu0 %v804
        %943 = vmatpush1.msra.mxu0 %v803
        %944 = vmatprep.subr.mxu0 %v808
        %945 = vmatpush1.msra.mxu0 %v807
        %946 = vmatprep.subr.mxu0 %v812
        %947 = vmatpush1.msra.mxu0 %v811
        %948 = vmatprep.subr.mxu0 %v816
        %949 = vmatpush1.msra.mxu0 %v815
        %950 = vmatprep.subr.mxu0 %v820
        %951 = vmatpush1.msra.mxu0 %v819
        %952 = vmatprep.subr.mxu0 %v824
        %953 = vmatpush1.msra.mxu0 %v823
        %954 = vmatprep.subr.mxu0 %v828
        %955 = vmatpush1.msra.mxu0 %v827
        %956 = vmatprep.subr.mxu0 %v832
        %957 = vmatpush1.msra.mxu0 %v831
        %958 = vmatprep.subr.mxu0 0.0
        %959 = vmatpush1.msra.mxu0 0.0
        %960 = vmatprep.subr.mxu0 0.0
        %961 = vmatpush1.msra.mxu0 0.0
        %962 = vmatprep.subr.mxu0 0.0
        %963 = vmatpush1.msra.mxu0 0.0
        %964 = vmatprep.subr.mxu0 0.0
        %965 = vmatpush1.msra.mxu0 0.0
        %966 = vmatprep.subr.mxu0 0.0
        %967 = vmatpush1.msra.mxu0 0.0
        %968 = vmatprep.subr.mxu0 0.0
        %969 = vmatpush1.msra.mxu0 0.0
        %970 = vmatprep.subr.mxu0 0.0
        %971 = vmatpush1.msra.mxu0 0.0
        %972 = vmatprep.subr.mxu0 0.0
        %973 = vmatpush1.msra.mxu0 0.0
        %974 = vmatprep.subr.mxu0 0.0
        %975 = vmatpush1.msra.mxu0 0.0
        %976 = vmatprep.subr.mxu0 0.0
        %977 = vmatpush1.msra.mxu0 0.0
        %978 = vmatprep.subr.mxu0 0.0
        %979 = vmatpush1.msra.mxu0 0.0
        %980 = vmatprep.subr.mxu0 0.0
        %981 = vmatpush1.msra.mxu0 0.0
        %982 = vmatprep.subr.mxu0 0.0
        %983 = vmatpush1.msra.mxu0 0.0
        %984 = vmatprep.subr.mxu0 0.0
        %985 = vmatpush1.msra.mxu0 0.0
        %986 = vmatprep.subr.mxu0 0.0
        %987 = vmatpush1.msra.mxu0 0.0
        %988 = vmatprep.subr.mxu0 0.0
        %989 = vmatpush1.msra.mxu0 0.0
        %990 = vmatprep.mubr.f32.mxu0 0.0
        %991 = vmatmul.mubr.f32.gmra.mrb[0].mxu0 %v768
        %v992 = vpop.f32.mrb[0].mxu0
        %v993 = vadd.f32 %v846, %v992
        %v994 = vpop.f32.mrb[0].mxu0
        %v995 = vadd.f32 %v850, %v994
        %996 = vdwg.mxu0
        %v997 = vmax.f32 %v922, 0.0
        %v998 = vmax.f32 %v924, 0.0
        %v999 = vmax.f32 %v993, 0.0
        %v1000 = vmax.f32 %v995, 0.0
        %v1001 = vld [vmem:[#allocation5] sm:$0xff]
        %v1002 = vld [vmem:[#allocation5 + $0x8] sm:$0xff]
        %v1003 = vld [vmem:[#allocation5 + $0x10] sm:$0xff]
        %v1004 = vld [vmem:[#allocation5 + $0x18] sm:$0xff]
        %v1005 = vld [vmem:[#allocation5 + $0x20] sm:$0xff]
        %v1006 = vld [vmem:[#allocation5 + $0x28] sm:$0xff]
        %v1007 = vld [vmem:[#allocation5 + $0x30] sm:$0xff]
        %v1008 = vld [vmem:[#allocation5 + $0x38] sm:$0xff]
        %v1009 = vld [vmem:[#allocation5 + $0x40] sm:$0xff]
        %v1010 = vld [vmem:[#allocation5 + $0x48] sm:$0xff]
        %v1011 = vld [vmem:[#allocation5 + $0x50] sm:$0xff]
        %v1012 = vld [vmem:[#allocation5 + $0x58] sm:$0xff]
        %v1013 = vld [vmem:[#allocation5 + $0x60] sm:$0xff]
        %v1014 = vld [vmem:[#allocation5 + $0x68] sm:$0xff]
        %v1015 = vld [vmem:[#allocation5 + $0x70] sm:$0xff]
        %v1016 = vld [vmem:[#allocation5 + $0x78] sm:$0xff]
        %v1017 = vld [vmem:[#allocation5 + $0x80] sm:$0xff]
        %v1018 = vld [vmem:[#allocation5 + $0x88] sm:$0xff]
        %v1019 = vld [vmem:[#allocation5 + $0x90] sm:$0xff]
        %v1020 = vld [vmem:[#allocation5 + $0x98] sm:$0xff]
        %v1021 = vld [vmem:[#allocation5 + $0xa0] sm:$0xff]
        %v1022 = vld [vmem:[#allocation5 + $0xa8] sm:$0xff]
        %v1023 = vld [vmem:[#allocation5 + $0xb0] sm:$0xff]
        %v1024 = vld [vmem:[#allocation5 + $0xb8] sm:$0xff]
        %v1025 = vld [vmem:[#allocation5 + $0xc0] sm:$0xff]
        %v1026 = vld [vmem:[#allocation5 + $0xc8] sm:$0xff]
        %v1027 = vld [vmem:[#allocation5 + $0xd0] sm:$0xff]
        %v1028 = vld [vmem:[#allocation5 + $0xd8] sm:$0xff]
        %v1029 = vld [vmem:[#allocation5 + $0xe0] sm:$0xff]
        %v1030 = vld [vmem:[#allocation5 + $0xe8] sm:$0xff]
        %v1031 = vld [vmem:[#allocation5 + $0xf0] sm:$0xff]
        %v1032 = vld [vmem:[#allocation5 + $0xf8] sm:$0xff]
        %v1033 = vld [vmem:[#allocation5 + $0x100] sm:$0xff]
        %v1034 = vld [vmem:[#allocation5 + $0x108] sm:$0xff]
        %v1035 = vld [vmem:[#allocation5 + $0x110] sm:$0xff]
        %v1036 = vld [vmem:[#allocation5 + $0x118] sm:$0xff]
        %v1037 = vld [vmem:[#allocation5 + $0x120] sm:$0xff]
        %v1038 = vld [vmem:[#allocation5 + $0x128] sm:$0xff]
        %v1039 = vld [vmem:[#allocation5 + $0x130] sm:$0xff]
        %v1040 = vld [vmem:[#allocation5 + $0x138] sm:$0xff]
        %v1041 = vld [vmem:[#allocation5 + $0x140] sm:$0xff]
        %v1042 = vld [vmem:[#allocation5 + $0x148] sm:$0xff]
        %v1043 = vld [vmem:[#allocation5 + $0x150] sm:$0xff]
        %v1044 = vld [vmem:[#allocation5 + $0x158] sm:$0xff]
        %v1045 = vld [vmem:[#allocation5 + $0x160] sm:$0xff]
        %v1046 = vld [vmem:[#allocation5 + $0x168] sm:$0xff]
        %v1047 = vld [vmem:[#allocation5 + $0x170] sm:$0xff]
        %v1048 = vld [vmem:[#allocation5 + $0x178] sm:$0xff]
        %v1049 = vld [vmem:[#allocation5 + $0x180] sm:$0xff]
        %v1050 = vld [vmem:[#allocation5 + $0x188] sm:$0xff]
        %v1051 = vld [vmem:[#allocation5 + $0x190] sm:$0xff]
        %v1052 = vld [vmem:[#allocation5 + $0x198] sm:$0xff]
        %v1053 = vld [vmem:[#allocation5 + $0x1a0] sm:$0xff]
        %v1054 = vld [vmem:[#allocation5 + $0x1a8] sm:$0xff]
        %v1055 = vld [vmem:[#allocation5 + $0x1b0] sm:$0xff]
        %v1056 = vld [vmem:[#allocation5 + $0x1b8] sm:$0xff]
        %v1057 = vld [vmem:[#allocation5 + $0x1c0] sm:$0xff]
        %v1058 = vld [vmem:[#allocation5 + $0x1c8] sm:$0xff]
        %v1059 = vld [vmem:[#allocation5 + $0x1d0] sm:$0xff]
        %v1060 = vld [vmem:[#allocation5 + $0x1d8] sm:$0xff]
        %v1061 = vld [vmem:[#allocation5 + $0x1e0] sm:$0xff]
        %v1062 = vld [vmem:[#allocation5 + $0x1e8] sm:$0xff]
        %v1063 = vld [vmem:[#allocation5 + $0x1f0] sm:$0xff]
        %v1064 = vld [vmem:[#allocation5 + $0x1f8] sm:$0xff]
        %v1065 = vld [vmem:[#allocation5 + $0x200] sm:$0xff]
        %v1066 = vld [vmem:[#allocation5 + $0x208] sm:$0xff]
        %v1067 = vld [vmem:[#allocation5 + $0x210] sm:$0xff]
        %v1068 = vld [vmem:[#allocation5 + $0x218] sm:$0xff]
        %v1069 = vld [vmem:[#allocation5 + $0x220] sm:$0xff]
        %v1070 = vld [vmem:[#allocation5 + $0x228] sm:$0xff]
        %v1071 = vld [vmem:[#allocation5 + $0x230] sm:$0xff]
        %v1072 = vld [vmem:[#allocation5 + $0x238] sm:$0xff]
        %v1073 = vld [vmem:[#allocation5 + $0x240] sm:$0xff]
        %v1074 = vld [vmem:[#allocation5 + $0x248] sm:$0xff]
        %v1075 = vld [vmem:[#allocation5 + $0x250] sm:$0xff]
        %v1076 = vld [vmem:[#allocation5 + $0x258] sm:$0xff]
        %v1077 = vld [vmem:[#allocation5 + $0x260] sm:$0xff]
        %v1078 = vld [vmem:[#allocation5 + $0x268] sm:$0xff]
        %v1079 = vld [vmem:[#allocation5 + $0x270] sm:$0xff]
        %v1080 = vld [vmem:[#allocation5 + $0x278] sm:$0xff]
        %v1081 = vld [vmem:[#allocation5 + $0x280] sm:$0xff]
        %v1082 = vld [vmem:[#allocation5 + $0x288] sm:$0xff]
        %v1083 = vld [vmem:[#allocation5 + $0x290] sm:$0xff]
        %v1084 = vld [vmem:[#allocation5 + $0x298] sm:$0xff]
        %v1085 = vld [vmem:[#allocation5 + $0x2a0] sm:$0xff]
        %v1086 = vld [vmem:[#allocation5 + $0x2a8] sm:$0xff]
        %v1087 = vld [vmem:[#allocation5 + $0x2b0] sm:$0xff]
        %v1088 = vld [vmem:[#allocation5 + $0x2b8] sm:$0xff]
        %v1089 = vld [vmem:[#allocation5 + $0x2c0] sm:$0xff]
        %v1090 = vld [vmem:[#allocation5 + $0x2c8] sm:$0xff]
        %v1091 = vld [vmem:[#allocation5 + $0x2d0] sm:$0xff]
        %v1092 = vld [vmem:[#allocation5 + $0x2d8] sm:$0xff]
        %v1093 = vld [vmem:[#allocation5 + $0x2e0] sm:$0xff]
        %v1094 = vld [vmem:[#allocation5 + $0x2e8] sm:$0xff]
        %v1095 = vld [vmem:[#allocation5 + $0x2f0] sm:$0xff]
        %v1096 = vld [vmem:[#allocation5 + $0x2f8] sm:$0xff]
        %v1097 = vld [vmem:[#allocation5 + $0x300] sm:$0xff]
        %v1098 = vld [vmem:[#allocation5 + $0x308] sm:$0xff]
        %v1099 = vld [vmem:[#allocation5 + $0x310] sm:$0xff]
        %v1100 = vld [vmem:[#allocation5 + $0x318] sm:$0xff]
        %v1101 = vld [vmem:[#allocation5 + $0x320] sm:$0xff]
        %v1102 = vld [vmem:[#allocation5 + $0x328] sm:$0xff]
        %v1103 = vld [vmem:[#allocation5 + $0x330] sm:$0xff]
        %v1104 = vld [vmem:[#allocation5 + $0x338] sm:$0xff]
        %v1105 = vld [vmem:[#allocation5 + $0x340] sm:$0xff]
        %v1106 = vld [vmem:[#allocation5 + $0x348] sm:$0xff]
        %v1107 = vld [vmem:[#allocation5 + $0x350] sm:$0xff]
        %v1108 = vld [vmem:[#allocation5 + $0x358] sm:$0xff]
        %v1109 = vld [vmem:[#allocation5 + $0x360] sm:$0xff]
        %v1110 = vld [vmem:[#allocation5 + $0x368] sm:$0xff]
        %v1111 = vld [vmem:[#allocation5 + $0x370] sm:$0xff]
        %v1112 = vld [vmem:[#allocation5 + $0x378] sm:$0xff]
        %v1113 = vld [vmem:[#allocation5 + $0x380] sm:$0xff]
        %v1114 = vld [vmem:[#allocation5 + $0x388] sm:$0xff]
        %v1115 = vld [vmem:[#allocation5 + $0x390] sm:$0xff]
        %v1116 = vld [vmem:[#allocation5 + $0x398] sm:$0xff]
        %v1117 = vld [vmem:[#allocation5 + $0x3a0] sm:$0xff]
        %v1118 = vld [vmem:[#allocation5 + $0x3a8] sm:$0xff]
        %v1119 = vld [vmem:[#allocation5 + $0x3b0] sm:$0xff]
        %v1120 = vld [vmem:[#allocation5 + $0x3b8] sm:$0xff]
        %v1121 = vld [vmem:[#allocation5 + $0x3c0] sm:$0xff]
        %v1122 = vld [vmem:[#allocation5 + $0x3c8] sm:$0xff]
        %v1123 = vld [vmem:[#allocation5 + $0x3d0] sm:$0xff]
        %v1124 = vld [vmem:[#allocation5 + $0x3d8] sm:$0xff]
        %v1125 = vld [vmem:[#allocation5 + $0x3e0] sm:$0xff]
        %v1126 = vld [vmem:[#allocation5 + $0x3e8] sm:$0xff]
        %v1127 = vld [vmem:[#allocation5 + $0x3f0] sm:$0xff]
        %v1128 = vld [vmem:[#allocation5 + $0x3f8] sm:$0xff]
        %v1129 = vld [vmem:[%s5] sm:$0x3]
        %v1131 = vlaneseq
        %v1132 = vshrl.u32 %v1131, 7
        %v1133 = vsub.s32 0, %v1132
        %v1134 = vrot.slane %v1129, %v1133
        %v1135 = vlaneseq
        %v1136 = vshrl.u32 %v1135, 7
        %v1137 = vsub.s32 1, %v1136
        %v1138 = vrot.slane %v1129, %v1137
        %1141 = vmatprep.subr.mxu0 %v1002
        %1142 = vmatpush1.msra.mxu0 %v1001
        %1143 = vmatprep.subr.mxu0 %v1004
        %1144 = vmatpush1.msra.mxu0 %v1003
        %1145 = vmatprep.subr.mxu0 %v1006
        %1146 = vmatpush1.msra.mxu0 %v1005
        %1147 = vmatprep.subr.mxu0 %v1008
        %1148 = vmatpush1.msra.mxu0 %v1007
        %1149 = vmatprep.subr.mxu0 %v1010
        %1150 = vmatpush1.msra.mxu0 %v1009
        %1151 = vmatprep.subr.mxu0 %v1012
        %1152 = vmatpush1.msra.mxu0 %v1011
        %1153 = vmatprep.subr.mxu0 %v1014
        %1154 = vmatpush1.msra.mxu0 %v1013
        %1155 = vmatprep.subr.mxu0 %v1016
        %1156 = vmatpush1.msra.mxu0 %v1015
        %1157 = vmatprep.subr.mxu0 %v1018
        %1158 = vmatpush1.msra.mxu0 %v1017
        %1159 = vmatprep.subr.mxu0 %v1020
        %1160 = vmatpush1.msra.mxu0 %v1019
        %1161 = vmatprep.subr.mxu0 %v1022
        %1162 = vmatpush1.msra.mxu0 %v1021
        %1163 = vmatprep.subr.mxu0 %v1024
        %1164 = vmatpush1.msra.mxu0 %v1023
        %1165 = vmatprep.subr.mxu0 %v1026
        %1166 = vmatpush1.msra.mxu0 %v1025
        %1167 = vmatprep.subr.mxu0 %v1028
        %1168 = vmatpush1.msra.mxu0 %v1027
        %1169 = vmatprep.subr.mxu0 %v1030
        %1170 = vmatpush1.msra.mxu0 %v1029
        %1171 = vmatprep.subr.mxu0 %v1032
        %1172 = vmatpush1.msra.mxu0 %v1031
        %1173 = vmatprep.subr.mxu0 %v1034
        %1174 = vmatpush1.msra.mxu0 %v1033
        %1175 = vmatprep.subr.mxu0 %v1036
        %1176 = vmatpush1.msra.mxu0 %v1035
        %1177 = vmatprep.subr.mxu0 %v1038
        %1178 = vmatpush1.msra.mxu0 %v1037
        %1179 = vmatprep.subr.mxu0 %v1040
        %1180 = vmatpush1.msra.mxu0 %v1039
        %1181 = vmatprep.subr.mxu0 %v1042
        %1182 = vmatpush1.msra.mxu0 %v1041
        %1183 = vmatprep.subr.mxu0 %v1044
        %1184 = vmatpush1.msra.mxu0 %v1043
        %1185 = vmatprep.subr.mxu0 %v1046
        %1186 = vmatpush1.msra.mxu0 %v1045
        %1187 = vmatprep.subr.mxu0 %v1048
        %1188 = vmatpush1.msra.mxu0 %v1047
        %1189 = vmatprep.subr.mxu0 %v1050
        %1190 = vmatpush1.msra.mxu0 %v1049
        %1191 = vmatprep.subr.mxu0 %v1052
        %1192 = vmatpush1.msra.mxu0 %v1051
        %1193 = vmatprep.subr.mxu0 %v1054
        %1194 = vmatpush1.msra.mxu0 %v1053
        %1195 = vmatprep.subr.mxu0 %v1056
        %1196 = vmatpush1.msra.mxu0 %v1055
        %1197 = vmatprep.subr.mxu0 %v1058
        %1198 = vmatpush1.msra.mxu0 %v1057
        %1199 = vmatprep.subr.mxu0 %v1060
        %1200 = vmatpush1.msra.mxu0 %v1059
        %1201 = vmatprep.subr.mxu0 %v1062
        %1202 = vmatpush1.msra.mxu0 %v1061
        %1203 = vmatprep.subr.mxu0 %v1064
        %1204 = vmatpush1.msra.mxu0 %v1063
        %1205 = vmatprep.mubr.f32.mxu0 %v998
        %1206 = vmatmul.mubr.f32.gmra.mrb[0].mxu0 %v997
        %v1207 = vpop.f32.mrb[0].mxu0
        %v1208 = vadd.f32 %v1134, %v1207
        %v1209 = vpop.f32.mrb[0].mxu0
        %v1210 = vadd.f32 %v1138, %v1209
        %1211 = vdwg.mxu0
        %1212 = vmatprep.subr.mxu0 %v1066
        %1213 = vmatpush1.msra.mxu0 %v1065
        %1214 = vmatprep.subr.mxu0 %v1068
        %1215 = vmatpush1.msra.mxu0 %v1067
        %1216 = vmatprep.subr.mxu0 %v1070
        %1217 = vmatpush1.msra.mxu0 %v1069
        %1218 = vmatprep.subr.mxu0 %v1072
        %1219 = vmatpush1.msra.mxu0 %v1071
        %1220 = vmatprep.subr.mxu0 %v1074
        %1221 = vmatpush1.msra.mxu0 %v1073
        %1222 = vmatprep.subr.mxu0 %v1076
        %1223 = vmatpush1.msra.mxu0 %v1075
        %1224 = vmatprep.subr.mxu0 %v1078
        %1225 = vmatpush1.msra.mxu0 %v1077
        %1226 = vmatprep.subr.mxu0 %v1080
        %1227 = vmatpush1.msra.mxu0 %v1079
        %1228 = vmatprep.subr.mxu0 %v1082
        %1229 = vmatpush1.msra.mxu0 %v1081
        %1230 = vmatprep.subr.mxu0 %v1084
        %1231 = vmatpush1.msra.mxu0 %v1083
        %1232 = vmatprep.subr.mxu0 %v1086
        %1233 = vmatpush1.msra.mxu0 %v1085
        %1234 = vmatprep.subr.mxu0 %v1088
        %1235 = vmatpush1.msra.mxu0 %v1087
        %1236 = vmatprep.subr.mxu0 %v1090
        %1237 = vmatpush1.msra.mxu0 %v1089
        %1238 = vmatprep.subr.mxu0 %v1092
        %1239 = vmatpush1.msra.mxu0 %v1091
        %1240 = vmatprep.subr.mxu0 %v1094
        %1241 = vmatpush1.msra.mxu0 %v1093
        %1242 = vmatprep.subr.mxu0 %v1096
        %1243 = vmatpush1.msra.mxu0 %v1095
        %1244 = vmatprep.subr.mxu0 %v1098
        %1245 = vmatpush1.msra.mxu0 %v1097
        %1246 = vmatprep.subr.mxu0 %v1100
        %1247 = vmatpush1.msra.mxu0 %v1099
        %1248 = vmatprep.subr.mxu0 %v1102
        %1249 = vmatpush1.msra.mxu0 %v1101
        %1250 = vmatprep.subr.mxu0 %v1104
        %1251 = vmatpush1.msra.mxu0 %v1103
        %1252 = vmatprep.subr.mxu0 %v1106
        %1253 = vmatpush1.msra.mxu0 %v1105
        %1254 = vmatprep.subr.mxu0 %v1108
        %1255 = vmatpush1.msra.mxu0 %v1107
        %1256 = vmatprep.subr.mxu0 %v1110
        %1257 = vmatpush1.msra.mxu0 %v1109
        %1258 = vmatprep.subr.mxu0 %v1112
        %1259 = vmatpush1.msra.mxu0 %v1111
        %1260 = vmatprep.subr.mxu0 %v1114
        %1261 = vmatpush1.msra.mxu0 %v1113
        %1262 = vmatprep.subr.mxu0 %v1116
        %1263 = vmatpush1.msra.mxu0 %v1115
        %1264 = vmatprep.subr.mxu0 %v1118
        %1265 = vmatpush1.msra.mxu0 %v1117
        %1266 = vmatprep.subr.mxu0 %v1120
        %1267 = vmatpush1.msra.mxu0 %v1119
        %1268 = vmatprep.subr.mxu0 %v1122
        %1269 = vmatpush1.msra.mxu0 %v1121
        %1270 = vmatprep.subr.mxu0 %v1124
        %1271 = vmatpush1.msra.mxu0 %v1123
        %1272 = vmatprep.subr.mxu0 %v1126
        %1273 = vmatpush1.msra.mxu0 %v1125
        %1274 = vmatprep.subr.mxu0 %v1128
        %1275 = vmatpush1.msra.mxu0 %v1127
        %1276 = vmatprep.mubr.f32.mxu0 %v1000
        %1277 = vmatmul.mubr.f32.gmra.mrb[0].mxu0 %v999
        %v1278 = vpop.f32.mrb[0].mxu0
        %v1279 = vadd.f32 %v1208, %v1278
        %v1280 = vpop.f32.mrb[0].mxu0
        %v1281 = vadd.f32 %v1210, %v1280
        %1282 = vdwg.mxu0
        %v1283 = vmax.f32 %v1279, 0.0
        %v1284 = vmax.f32 %v1281, 0.0
        %v1285 = vld [vmem:[#allocation7] sm:$0xff]
        %v1286 = vld [vmem:[#allocation7 + $0x8] sm:$0xff]
        %v1287 = vld [vmem:[#allocation7 + $0x10] sm:$0xff]
        %v1288 = vld [vmem:[#allocation7 + $0x18] sm:$0xff]
        %v1289 = vld [vmem:[#allocation7 + $0x20] sm:$0xff]
        %v1290 = vld [vmem:[#allocation7 + $0x28] sm:$0xff]
        %v1291 = vld [vmem:[#allocation7 + $0x30] sm:$0xff]
        %v1292 = vld [vmem:[#allocation7 + $0x38] sm:$0xff]
        %v1293 = vld [vmem:[#allocation7 + $0x40] sm:$0xff]
        %v1294 = vld [vmem:[#allocation7 + $0x48] sm:$0xff]
        %v1295 = vld [vmem:[#allocation7 + $0x50] sm:$0xff]
        %v1296 = vld [vmem:[#allocation7 + $0x58] sm:$0xff]
        %v1297 = vld [vmem:[#allocation7 + $0x60] sm:$0xff]
        %v1298 = vld [vmem:[#allocation7 + $0x68] sm:$0xff]
        %v1299 = vld [vmem:[#allocation7 + $0x70] sm:$0xff]
        %v1300 = vld [vmem:[#allocation7 + $0x78] sm:$0xff]
        %v1301 = vld [vmem:[#allocation7 + $0x80] sm:$0xff]
        %v1302 = vld [vmem:[#allocation7 + $0x88] sm:$0xff]
        %v1303 = vld [vmem:[#allocation7 + $0x90] sm:$0xff]
        %v1304 = vld [vmem:[#allocation7 + $0x98] sm:$0xff]
        %v1305 = vld [vmem:[#allocation7 + $0xa0] sm:$0xff]
        %v1306 = vld [vmem:[#allocation7 + $0xa8] sm:$0xff]
        %v1307 = vld [vmem:[#allocation7 + $0xb0] sm:$0xff]
        %v1308 = vld [vmem:[#allocation7 + $0xb8] sm:$0xff]
        %v1309 = vld [vmem:[#allocation7 + $0xc0] sm:$0xff]
        %v1310 = vld [vmem:[#allocation7 + $0xc8] sm:$0xff]
        %v1311 = vld [vmem:[#allocation7 + $0xd0] sm:$0xff]
        %v1312 = vld [vmem:[#allocation7 + $0xd8] sm:$0xff]
        %v1313 = vld [vmem:[#allocation7 + $0xe0] sm:$0xff]
        %v1314 = vld [vmem:[#allocation7 + $0xe8] sm:$0xff]
        %v1315 = vld [vmem:[#allocation7 + $0xf0] sm:$0xff]
        %v1316 = vld [vmem:[#allocation7 + $0xf8] sm:$0xff]
        %v1317 = vld [vmem:[%s7] sm:$0x1]
        %v1319 = vlaneseq
        %v1320 = vshrl.u32 %v1319, 7
        %v1321 = vsub.s32 0, %v1320
        %v1322 = vrot.slane %v1317, %v1321
        %1324 = vmatprep.subr.mxu0 0.0
        %1325 = vmatpush1.msra.mxu0 %v1285
        %1326 = vmatprep.subr.mxu0 0.0
        %1327 = vmatpush1.msra.mxu0 %v1286
        %1328 = vmatprep.subr.mxu0 0.0
        %1329 = vmatpush1.msra.mxu0 %v1287
        %1330 = vmatprep.subr.mxu0 0.0
        %1331 = vmatpush1.msra.mxu0 %v1288
        %1332 = vmatprep.subr.mxu0 0.0
        %1333 = vmatpush1.msra.mxu0 %v1289
        %1334 = vmatprep.subr.mxu0 0.0
        %1335 = vmatpush1.msra.mxu0 %v1290
        %1336 = vmatprep.subr.mxu0 0.0
        %1337 = vmatpush1.msra.mxu0 %v1291
        %1338 = vmatprep.subr.mxu0 0.0
        %1339 = vmatpush1.msra.mxu0 %v1292
        %1340 = vmatprep.subr.mxu0 0.0
        %1341 = vmatpush1.msra.mxu0 %v1293
        %1342 = vmatprep.subr.mxu0 0.0
        %1343 = vmatpush1.msra.mxu0 %v1294
        %1344 = vmatprep.subr.mxu0 0.0
        %1345 = vmatpush1.msra.mxu0 %v1295
        %1346 = vmatprep.subr.mxu0 0.0
        %1347 = vmatpush1.msra.mxu0 %v1296
        %1348 = vmatprep.subr.mxu0 0.0
        %1349 = vmatpush1.msra.mxu0 %v1297
        %1350 = vmatprep.subr.mxu0 0.0
        %1351 = vmatpush1.msra.mxu0 %v1298
        %1352 = vmatprep.subr.mxu0 0.0
        %1353 = vmatpush1.msra.mxu0 %v1299
        %1354 = vmatprep.subr.mxu0 0.0
        %1355 = vmatpush1.msra.mxu0 %v1300
        %1356 = vmatprep.subr.mxu0 0.0
        %1357 = vmatpush1.msra.mxu0 %v1301
        %1358 = vmatprep.subr.mxu0 0.0
        %1359 = vmatpush1.msra.mxu0 %v1302
        %1360 = vmatprep.subr.mxu0 0.0
        %1361 = vmatpush1.msra.mxu0 %v1303
        %1362 = vmatprep.subr.mxu0 0.0
        %1363 = vmatpush1.msra.mxu0 %v1304
        %1364 = vmatprep.subr.mxu0 0.0
        %1365 = vmatpush1.msra.mxu0 %v1305
        %1366 = vmatprep.subr.mxu0 0.0
        %1367 = vmatpush1.msra.mxu0 %v1306
        %1368 = vmatprep.subr.mxu0 0.0
        %1369 = vmatpush1.msra.mxu0 %v1307
        %1370 = vmatprep.subr.mxu0 0.0
        %1371 = vmatpush1.msra.mxu0 %v1308
        %1372 = vmatprep.subr.mxu0 0.0
        %1373 = vmatpush1.msra.mxu0 %v1309
        %1374 = vmatprep.subr.mxu0 0.0
        %1375 = vmatpush1.msra.mxu0 %v1310
        %1376 = vmatprep.subr.mxu0 0.0
        %1377 = vmatpush1.msra.mxu0 %v1311
        %1378 = vmatprep.subr.mxu0 0.0
        %1379 = vmatpush1.msra.mxu0 %v1312
        %1380 = vmatprep.subr.mxu0 0.0
        %1381 = vmatpush1.msra.mxu0 %v1313
        %1382 = vmatprep.subr.mxu0 0.0
        %1383 = vmatpush1.msra.mxu0 %v1314
        %1384 = vmatprep.subr.mxu0 0.0
        %1385 = vmatpush1.msra.mxu0 %v1315
        %1386 = vmatprep.subr.mxu0 0.0
        %1387 = vmatpush1.msra.mxu0 %v1316
        %1388 = vmatprep.mubr.f32.mxu0 %v1284
        %1389 = vmatmul.mubr.f32.gmra.mrb[0].mxu0 %v1283
        %v1390 = vpop.f32.mrb[0].mxu0
        %v1391 = vadd.f32 %v1322, %v1390
        %v1392 = vpop.f32.mrb[0].mxu0
        %1393 = vdwg.mxu0
        %v1394 = vmax.f32 %v1391, 0.0
        %v1395 = vld [vmem:[%s8] sm:$0xff]
        %v1396 = vld [vmem:[%s8 + $0x8] sm:$0xff]
        %v1397 = vld [vmem:[%s8 + $0x10] sm:$0xff]
        %v1398 = vld [vmem:[%s8 + $0x18] sm:$0xff]
        %v1399 = vld [vmem:[%s8 + $0x20] sm:$0xff]
        %v1400 = vld [vmem:[%s8 + $0x28] sm:$0xff]
        %v1401 = vld [vmem:[%s8 + $0x30] sm:$0xff]
        %v1402 = vld [vmem:[%s8 + $0x38] sm:$0xff]
        %v1403 = vld [vmem:[%s8 + $0x40] sm:$0xff]
        %v1404 = vld [vmem:[%s8 + $0x48] sm:$0xff]
        %v1405 = vld [vmem:[%s8 + $0x50] sm:$0xff]
        %v1406 = vld [vmem:[%s8 + $0x58] sm:$0xff]
        %v1407 = vld [vmem:[%s8 + $0x60] sm:$0xff]
        %v1408 = vld [vmem:[%s8 + $0x68] sm:$0xff]
        %v1409 = vld [vmem:[%s8 + $0x70] sm:$0xff]
        %v1410 = vld [vmem:[%s8 + $0x78] sm:$0xff]
        %v1411 = vld [vmem:[%s9] sm:$0x1]
        %v1413 = vlaneseq
        %v1414 = vshrl.u32 %v1413, 7
        %v1415 = vsub.s32 0, %v1414
        %v1416 = vrot.slane %v1411, %v1415
        %1418 = vmatprep.subr.mxu0 0.0
        %1419 = vmatpush1.msra.mxu0 %v1395
        %1420 = vmatprep.subr.mxu0 0.0
        %1421 = vmatpush1.msra.mxu0 %v1396
        %1422 = vmatprep.subr.mxu0 0.0
        %1423 = vmatpush1.msra.mxu0 %v1397
        %1424 = vmatprep.subr.mxu0 0.0
        %1425 = vmatpush1.msra.mxu0 %v1398
        %1426 = vmatprep.subr.mxu0 0.0
        %1427 = vmatpush1.msra.mxu0 %v1399
        %1428 = vmatprep.subr.mxu0 0.0
        %1429 = vmatpush1.msra.mxu0 %v1400
        %1430 = vmatprep.subr.mxu0 0.0
        %1431 = vmatpush1.msra.mxu0 %v1401
        %1432 = vmatprep.subr.mxu0 0.0
        %1433 = vmatpush1.msra.mxu0 %v1402
        %1434 = vmatprep.subr.mxu0 0.0
        %1435 = vmatpush1.msra.mxu0 %v1403
        %1436 = vmatprep.subr.mxu0 0.0
        %1437 = vmatpush1.msra.mxu0 %v1404
        %1438 = vmatprep.subr.mxu0 0.0
        %1439 = vmatpush1.msra.mxu0 %v1405
        %1440 = vmatprep.subr.mxu0 0.0
        %1441 = vmatpush1.msra.mxu0 %v1406
        %1442 = vmatprep.subr.mxu0 0.0
        %1443 = vmatpush1.msra.mxu0 %v1407
        %1444 = vmatprep.subr.mxu0 0.0
        %1445 = vmatpush1.msra.mxu0 %v1408
        %1446 = vmatprep.subr.mxu0 0.0
        %1447 = vmatpush1.msra.mxu0 %v1409
        %1448 = vmatprep.subr.mxu0 0.0
        %1449 = vmatpush1.msra.mxu0 %v1410
        %1450 = vmatprep.subr.mxu0 0.0
        %1451 = vmatpush1.msra.mxu0 0.0
        %1452 = vmatprep.subr.mxu0 0.0
        %1453 = vmatpush1.msra.mxu0 0.0
        %1454 = vmatprep.subr.mxu0 0.0
        %1455 = vmatpush1.msra.mxu0 0.0
        %1456 = vmatprep.subr.mxu0 0.0
        %1457 = vmatpush1.msra.mxu0 0.0
        %1458 = vmatprep.subr.mxu0 0.0
        %1459 = vmatpush1.msra.mxu0 0.0
        %1460 = vmatprep.subr.mxu0 0.0
        %1461 = vmatpush1.msra.mxu0 0.0
        %1462 = vmatprep.subr.mxu0 0.0
        %1463 = vmatpush1.msra.mxu0 0.0
        %1464 = vmatprep.subr.mxu0 0.0
        %1465 = vmatpush1.msra.mxu0 0.0
        %1466 = vmatprep.subr.mxu0 0.0
        %1467 = vmatpush1.msra.mxu0 0.0
        %1468 = vmatprep.subr.mxu0 0.0
        %1469 = vmatpush1.msra.mxu0 0.0
        %1470 = vmatprep.subr.mxu0 0.0
        %1471 = vmatpush1.msra.mxu0 0.0
        %1472 = vmatprep.subr.mxu0 0.0
        %1473 = vmatpush1.msra.mxu0 0.0
        %1474 = vmatprep.subr.mxu0 0.0
        %1475 = vmatpush1.msra.mxu0 0.0
        %1476 = vmatprep.subr.mxu0 0.0
        %1477 = vmatpush1.msra.mxu0 0.0
        %1478 = vmatprep.subr.mxu0 0.0
        %1479 = vmatpush1.msra.mxu0 0.0
        %1480 = vmatprep.subr.mxu0 0.0
        %1481 = vmatpush1.msra.mxu0 0.0
        %1482 = vmatprep.mubr.f32.mxu0 0.0
        %1483 = vmatmul.mubr.f32.gmra.mrb[0].mxu0 %v1394
        %v1484 = vpop.f32.mrb[0].mxu0
        %v1485 = vadd.f32 %v1416, %v1484
        %v1486 = vpop.f32.mrb[0].mxu0
        %1487 = vdwg.mxu0
        %v1488 = vld [vmem:[%s10] sm:$0xff]
        %v1489 = vld [vmem:[%s10 + $0x8] sm:$0xff]
        %v1490 = vld [vmem:[%s10 + $0x10] sm:$0xff]
        %v1491 = vld [vmem:[%s10 + $0x18] sm:$0xff]
        %v1492 = vld [vmem:[%s10 + $0x20] sm:$0xff]
        %v1493 = vld [vmem:[%s10 + $0x28] sm:$0xff]
        %v1494 = vld [vmem:[%s10 + $0x30] sm:$0xff]
        %v1495 = vld [vmem:[%s10 + $0x38] sm:$0xff]
        %v1496 = vld [vmem:[%s11] sm:$0x1]
        %v1498 = vlaneseq
        %v1499 = vshrl.u32 %v1498, 7
        %v1500 = vsub.s32 0, %v1499
        %v1501 = vrot.slane %v1496, %v1500
        %vm1503 = vcmask 523264
        %v1505 = vsel %vm1503, %v1485, 0
        %1507 = vmatprep.subr.mxu0 0.0
        %1508 = vmatpush1.msra.mxu0 %v1488
        %1509 = vmatprep.subr.mxu0 0.0
        %1510 = vmatpush1.msra.mxu0 %v1489
        %1511 = vmatprep.subr.mxu0 0.0
        %1512 = vmatpush1.msra.mxu0 %v1490
        %1513 = vmatprep.subr.mxu0 0.0
        %1514 = vmatpush1.msra.mxu0 %v1491
        %1515 = vmatprep.subr.mxu0 0.0
        %1516 = vmatpush1.msra.mxu0 %v1492
        %1517 = vmatprep.subr.mxu0 0.0
        %1518 = vmatpush1.msra.mxu0 %v1493
        %1519 = vmatprep.subr.mxu0 0.0
        %1520 = vmatpush1.msra.mxu0 %v1494
        %1521 = vmatprep.subr.mxu0 0.0
        %1522 = vmatpush1.msra.mxu0 %v1495
        %1523 = vmatprep.subr.mxu0 0.0
        %1524 = vmatpush1.msra.mxu0 0.0
        %1525 = vmatprep.subr.mxu0 0.0
        %1526 = vmatpush1.msra.mxu0 0.0
        %1527 = vmatprep.subr.mxu0 0.0
        %1528 = vmatpush1.msra.mxu0 0.0
        %1529 = vmatprep.subr.mxu0 0.0
        %1530 = vmatpush1.msra.mxu0 0.0
        %1531 = vmatprep.subr.mxu0 0.0
        %1532 = vmatpush1.msra.mxu0 0.0
        %1533 = vmatprep.subr.mxu0 0.0
        %1534 = vmatpush1.msra.mxu0 0.0
        %1535 = vmatprep.subr.mxu0 0.0
        %1536 = vmatpush1.msra.mxu0 0.0
        %1537 = vmatprep.subr.mxu0 0.0
        %1538 = vmatpush1.msra.mxu0 0.0
        %1539 = vmatprep.subr.mxu0 0.0
        %1540 = vmatpush1.msra.mxu0 0.0
        %1541 = vmatprep.subr.mxu0 0.0
        %1542 = vmatpush1.msra.mxu0 0.0
        %1543 = vmatprep.subr.mxu0 0.0
        %1544 = vmatpush1.msra.mxu0 0.0
        %1545 = vmatprep.subr.mxu0 0.0
        %1546 = vmatpush1.msra.mxu0 0.0
        %1547 = vmatprep.subr.mxu0 0.0
        %1548 = vmatpush1.msra.mxu0 0.0
        %1549 = vmatprep.subr.mxu0 0.0
        %1550 = vmatpush1.msra.mxu0 0.0
        %1551 = vmatprep.subr.mxu0 0.0
        %1552 = vmatpush1.msra.mxu0 0.0
        %1553 = vmatprep.subr.mxu0 0.0
        %1554 = vmatpush1.msra.mxu0 0.0
        %1555 = vmatprep.subr.mxu0 0.0
        %1556 = vmatpush1.msra.mxu0 0.0
        %1557 = vmatprep.subr.mxu0 0.0
        %1558 = vmatpush1.msra.mxu0 0.0
        %1559 = vmatprep.subr.mxu0 0.0
        %1560 = vmatpush1.msra.mxu0 0.0
        %1561 = vmatprep.subr.mxu0 0.0
        %1562 = vmatpush1.msra.mxu0 0.0
        %1563 = vmatprep.subr.mxu0 0.0
        %1564 = vmatpush1.msra.mxu0 0.0
        %1565 = vmatprep.subr.mxu0 0.0
        %1566 = vmatpush1.msra.mxu0 0.0
        %1567 = vmatprep.subr.mxu0 0.0
        %1568 = vmatpush1.msra.mxu0 0.0
        %1569 = vmatprep.subr.mxu0 0.0
        %1570 = vmatpush1.msra.mxu0 0.0
        %1571 = vmatprep.mubr.f32.mxu0 0.0
        %1572 = vmatmul.mubr.f32.gmra.mrb[0].mxu0 %v1505
        %v1573 = vpop.f32.mrb[0].mxu0
        %v1574 = vadd.f32 %v1501, %v1573
        %v1575 = vpop.f32.mrb[0].mxu0
        %1576 = vdwg.mxu0
        %v1577 = vmul.f32 %v1574, 1.442695
        %v1578 = vpow.pop %v1577
        %v1579 = vld [vmem:[%s767] sm:$0xff]
        %1581 = vrot.lane.b32.xlu0 %v1579, 32
        %v1582 = vpop.permute.xlu0 %1581
        %v1584 = vmul.f32 %v1578, %v1582
        %1586 = vrot.lane.b32.xlu0 %v1584, 96
        %v1587 = vpop.permute.xlu0 %1586
        %v1589 = vadd.f32 %v1574, %v1587
        %vm1590 = vcmask 261120
        %1591 = vst.msk [vmem:[%s759] sm:$0xff] %vm1590, %v1589
        %v1592 = vld [vmem:[%s12] sm:$0xff]
        %v1593 = vld [vmem:[%s12 + $0x8] sm:$0xff]
        %v1594 = vld [vmem:[%s12 + $0x10] sm:$0xff]
        %v1595 = vld [vmem:[%s12 + $0x18] sm:$0xff]
        %v1596 = vld [vmem:[%s13] sm:$0x1]
        %v1598 = vlaneseq
        %v1599 = vshrl.u32 %v1598, 7
        %v1600 = vsub.s32 0, %v1599
        %v1601 = vrot.slane %v1596, %v1600
        %v1604 = vsel %vm1590, %v1589, 0
        %1606 = vmatprep.subr.mxu0 0.0
        %1607 = vmatpush1.msra.mxu0 %v1592
        %1608 = vmatprep.subr.mxu0 0.0
        %1609 = vmatpush1.msra.mxu0 %v1593
        %1610 = vmatprep.subr.mxu0 0.0
        %1611 = vmatpush1.msra.mxu0 %v1594
        %1612 = vmatprep.subr.mxu0 0.0
        %1613 = vmatpush1.msra.mxu0 %v1595
        %1614 = vmatprep.subr.mxu0 0.0
        %1615 = vmatpush1.msra.mxu0 0.0
        %1616 = vmatprep.subr.mxu0 0.0
        %1617 = vmatpush1.msra.mxu0 0.0
        %1618 = vmatprep.subr.mxu0 0.0
        %1619 = vmatpush1.msra.mxu0 0.0
        %1620 = vmatprep.subr.mxu0 0.0
        %1621 = vmatpush1.msra.mxu0 0.0
        %1622 = vmatprep.subr.mxu0 0.0
        %1623 = vmatpush1.msra.mxu0 0.0
        %1624 = vmatprep.subr.mxu0 0.0
        %1625 = vmatpush1.msra.mxu0 0.0
        %1626 = vmatprep.subr.mxu0 0.0
        %1627 = vmatpush1.msra.mxu0 0.0
        %1628 = vmatprep.subr.mxu0 0.0
        %1629 = vmatpush1.msra.mxu0 0.0
        %1630 = vmatprep.subr.mxu0 0.0
        %1631 = vmatpush1.msra.mxu0 0.0
        %1632 = vmatprep.subr.mxu0 0.0
        %1633 = vmatpush1.msra.mxu0 0.0
        %1634 = vmatprep.subr.mxu0 0.0
        %1635 = vmatpush1.msra.mxu0 0.0
        %1636 = vmatprep.subr.mxu0 0.0
        %1637 = vmatpush1.msra.mxu0 0.0
        %1638 = vmatprep.subr.mxu0 0.0
        %1639 = vmatpush1.msra.mxu0 0.0
        %1640 = vmatprep.subr.mxu0 0.0
        %1641 = vmatpush1.msra.mxu0 0.0
        %1642 = vmatprep.subr.mxu0 0.0
        %1643 = vmatpush1.msra.mxu0 0.0
        %1644 = vmatprep.subr.mxu0 0.0
        %1645 = vmatpush1.msra.mxu0 0.0
        %1646 = vmatprep.subr.mxu0 0.0
        %1647 = vmatpush1.msra.mxu0 0.0
        %1648 = vmatprep.subr.mxu0 0.0
        %1649 = vmatpush1.msra.mxu0 0.0
        %1650 = vmatprep.subr.mxu0 0.0
        %1651 = vmatpush1.msra.mxu0 0.0
        %1652 = vmatprep.subr.mxu0 0.0
        %1653 = vmatpush1.msra.mxu0 0.0
        %1654 = vmatprep.subr.mxu0 0.0
        %1655 = vmatpush1.msra.mxu0 0.0
        %1656 = vmatprep.subr.mxu0 0.0
        %1657 = vmatpush1.msra.mxu0 0.0
        %1658 = vmatprep.subr.mxu0 0.0
        %1659 = vmatpush1.msra.mxu0 0.0
        %1660 = vmatprep.subr.mxu0 0.0
        %1661 = vmatpush1.msra.mxu0 0.0
        %1662 = vmatprep.subr.mxu0 0.0
        %1663 = vmatpush1.msra.mxu0 0.0
        %1664 = vmatprep.subr.mxu0 0.0
        %1665 = vmatpush1.msra.mxu0 0.0
        %1666 = vmatprep.subr.mxu0 0.0
        %1667 = vmatpush1.msra.mxu0 0.0
        %1668 = vmatprep.subr.mxu0 0.0
        %1669 = vmatpush1.msra.mxu0 0.0
        %1670 = vmatprep.mubr.f32.mxu0 0.0
        %1671 = vmatmul.mubr.f32.gmra.mrb[0].mxu0 %v1604
        %v1672 = vpop.f32.mrb[0].mxu0
        %v1673 = vadd.f32 %v1601, %v1672
        %v1674 = vpop.f32.mrb[0].mxu0
        %1675 = vdwg.mxu0
        %v1676 = vmax.f32 %v1673, 0.0
        %v1677 = vld [vmem:[#allocation8] sm:$0xff]
        %v1678 = vld [vmem:[#allocation8 + $0x8] sm:$0xff]
        %v1679 = vld [vmem:[#allocation8 + $0x10] sm:$0xff]
        %v1680 = vld [vmem:[#allocation8 + $0x18] sm:$0xff]
        %v1681 = vld [vmem:[#allocation8 + $0x20] sm:$0xff]
        %v1682 = vld [vmem:[#allocation8 + $0x28] sm:$0xff]
        %v1683 = vld [vmem:[#allocation8 + $0x30] sm:$0xff]
        %v1684 = vld [vmem:[#allocation8 + $0x38] sm:$0xff]
        %v1685 = vld [vmem:[#allocation8 + $0x40] sm:$0xff]
        %v1686 = vld [vmem:[#allocation8 + $0x48] sm:$0xff]
        %v1687 = vld [vmem:[#allocation8 + $0x50] sm:$0xff]
        %v1688 = vld [vmem:[#allocation8 + $0x58] sm:$0xff]
        %v1689 = vld [vmem:[#allocation8 + $0x60] sm:$0xff]
        %v1690 = vld [vmem:[#allocation8 + $0x68] sm:$0xff]
        %v1691 = vld [vmem:[#allocation8 + $0x70] sm:$0xff]
        %v1692 = vld [vmem:[#allocation8 + $0x78] sm:$0xff]
        %v1693 = vld [vmem:[#allocation8 + $0x80] sm:$0xff]
        %v1694 = vld [vmem:[#allocation8 + $0x88] sm:$0xff]
        %v1695 = vld [vmem:[#allocation8 + $0x90] sm:$0xff]
        %v1696 = vld [vmem:[#allocation8 + $0x98] sm:$0xff]
        %v1697 = vld [vmem:[#allocation8 + $0xa0] sm:$0xff]
        %v1698 = vld [vmem:[#allocation8 + $0xa8] sm:$0xff]
        %v1699 = vld [vmem:[#allocation8 + $0xb0] sm:$0xff]
        %v1700 = vld [vmem:[#allocation8 + $0xb8] sm:$0xff]
        %v1701 = vld [vmem:[#allocation8 + $0xc0] sm:$0xff]
        %v1702 = vld [vmem:[#allocation8 + $0xc8] sm:$0xff]
        %v1703 = vld [vmem:[#allocation8 + $0xd0] sm:$0xff]
        %v1704 = vld [vmem:[#allocation8 + $0xd8] sm:$0xff]
        %v1705 = vld [vmem:[#allocation8 + $0xe0] sm:$0xff]
        %v1706 = vld [vmem:[#allocation8 + $0xe8] sm:$0xff]
        %v1707 = vld [vmem:[#allocation8 + $0xf0] sm:$0xff]
        %v1708 = vld [vmem:[#allocation8 + $0xf8] sm:$0xff]
        %v1709 = vld [vmem:[%s15] sm:$0x3]
        %v1711 = vlaneseq
        %v1712 = vshrl.u32 %v1711, 7
        %v1713 = vsub.s32 0, %v1712
        %v1714 = vrot.slane %v1709, %v1713
        %v1715 = vlaneseq
        %v1716 = vshrl.u32 %v1715, 7
        %v1717 = vsub.s32 1, %v1716
        %v1718 = vrot.slane %v1709, %v1717
        %1721 = vmatprep.subr.mxu0 %v1678
        %1722 = vmatpush1.msra.mxu0 %v1677
        %1723 = vmatprep.subr.mxu0 %v1680
        %1724 = vmatpush1.msra.mxu0 %v1679
        %1725 = vmatprep.subr.mxu0 %v1682
        %1726 = vmatpush1.msra.mxu0 %v1681
        %1727 = vmatprep.subr.mxu0 %v1684
        %1728 = vmatpush1.msra.mxu0 %v1683
        %1729 = vmatprep.subr.mxu0 %v1686
        %1730 = vmatpush1.msra.mxu0 %v1685
        %1731 = vmatprep.subr.mxu0 %v1688
        %1732 = vmatpush1.msra.mxu0 %v1687
        %1733 = vmatprep.subr.mxu0 %v1690
        %1734 = vmatpush1.msra.mxu0 %v1689
        %1735 = vmatprep.subr.mxu0 %v1692
        %1736 = vmatpush1.msra.mxu0 %v1691
        %1737 = vmatprep.subr.mxu0 %v1694
        %1738 = vmatpush1.msra.mxu0 %v1693
        %1739 = vmatprep.subr.mxu0 %v1696
        %1740 = vmatpush1.msra.mxu0 %v1695
        %1741 = vmatprep.subr.mxu0 %v1698
        %1742 = vmatpush1.msra.mxu0 %v1697
        %1743 = vmatprep.subr.mxu0 %v1700
        %1744 = vmatpush1.msra.mxu0 %v1699
        %1745 = vmatprep.subr.mxu0 %v1702
        %1746 = vmatpush1.msra.mxu0 %v1701
        %1747 = vmatprep.subr.mxu0 %v1704
        %1748 = vmatpush1.msra.mxu0 %v1703
        %1749 = vmatprep.subr.mxu0 %v1706
        %1750 = vmatpush1.msra.mxu0 %v1705
        %1751 = vmatprep.subr.mxu0 %v1708
        %1752 = vmatpush1.msra.mxu0 %v1707
        %1753 = vmatprep.subr.mxu0 0.0
        %1754 = vmatpush1.msra.mxu0 0.0
        %1755 = vmatprep.subr.mxu0 0.0
        %1756 = vmatpush1.msra.mxu0 0.0
        %1757 = vmatprep.subr.mxu0 0.0
        %1758 = vmatpush1.msra.mxu0 0.0
        %1759 = vmatprep.subr.mxu0 0.0
        %1760 = vmatpush1.msra.mxu0 0.0
        %1761 = vmatprep.subr.mxu0 0.0
        %1762 = vmatpush1.msra.mxu0 0.0
        %1763 = vmatprep.subr.mxu0 0.0
        %1764 = vmatpush1.msra.mxu0 0.0
        %1765 = vmatprep.subr.mxu0 0.0
        %1766 = vmatpush1.msra.mxu0 0.0
        %1767 = vmatprep.subr.mxu0 0.0
        %1768 = vmatpush1.msra.mxu0 0.0
        %1769 = vmatprep.subr.mxu0 0.0
        %1770 = vmatpush1.msra.mxu0 0.0
        %1771 = vmatprep.subr.mxu0 0.0
        %1772 = vmatpush1.msra.mxu0 0.0
        %1773 = vmatprep.subr.mxu0 0.0
        %1774 = vmatpush1.msra.mxu0 0.0
        %1775 = vmatprep.subr.mxu0 0.0
        %1776 = vmatpush1.msra.mxu0 0.0
        %1777 = vmatprep.subr.mxu0 0.0
        %1778 = vmatpush1.msra.mxu0 0.0
        %1779 = vmatprep.subr.mxu0 0.0
        %1780 = vmatpush1.msra.mxu0 0.0
        %1781 = vmatprep.subr.mxu0 0.0
        %1782 = vmatpush1.msra.mxu0 0.0
        %1783 = vmatprep.subr.mxu0 0.0
        %1784 = vmatpush1.msra.mxu0 0.0
        %1785 = vmatprep.mubr.f32.mxu0 0.0
        %1786 = vmatmul.mubr.f32.gmra.mrb[0].mxu0 %v1676
        %v1787 = vpop.f32.mrb[0].mxu0
        %v1788 = vadd.f32 %v1714, %v1787
        %v1789 = vpop.f32.mrb[0].mxu0
        %v1790 = vadd.f32 %v1718, %v1789
        %1791 = vdwg.mxu0
        %v1792 = vmax.f32 %v1788, 0.0
        %v1793 = vmax.f32 %v1790, 0.0
        %v1794 = vld [vmem:[#allocation10] sm:$0xff]
        %v1795 = vld [vmem:[#allocation10 + $0x8] sm:$0xff]
        %v1796 = vld [vmem:[#allocation10 + $0x10] sm:$0xff]
        %v1797 = vld [vmem:[#allocation10 + $0x18] sm:$0xff]
        %v1798 = vld [vmem:[#allocation10 + $0x20] sm:$0xff]
        %v1799 = vld [vmem:[#allocation10 + $0x28] sm:$0xff]
        %v1800 = vld [vmem:[#allocation10 + $0x30] sm:$0xff]
        %v1801 = vld [vmem:[#allocation10 + $0x38] sm:$0xff]
        %v1802 = vld [vmem:[#allocation10 + $0x40] sm:$0xff]
        %v1803 = vld [vmem:[#allocation10 + $0x48] sm:$0xff]
        %v1804 = vld [vmem:[#allocation10 + $0x50] sm:$0xff]
        %v1805 = vld [vmem:[#allocation10 + $0x58] sm:$0xff]
        %v1806 = vld [vmem:[#allocation10 + $0x60] sm:$0xff]
        %v1807 = vld [vmem:[#allocation10 + $0x68] sm:$0xff]
        %v1808 = vld [vmem:[#allocation10 + $0x70] sm:$0xff]
        %v1809 = vld [vmem:[#allocation10 + $0x78] sm:$0xff]
        %v1810 = vld [vmem:[#allocation10 + $0x80] sm:$0xff]
        %v1811 = vld [vmem:[#allocation10 + $0x88] sm:$0xff]
        %v1812 = vld [vmem:[#allocation10 + $0x90] sm:$0xff]
        %v1813 = vld [vmem:[#allocation10 + $0x98] sm:$0xff]
        %v1814 = vld [vmem:[#allocation10 + $0xa0] sm:$0xff]
        %v1815 = vld [vmem:[#allocation10 + $0xa8] sm:$0xff]
        %v1816 = vld [vmem:[#allocation10 + $0xb0] sm:$0xff]
        %v1817 = vld [vmem:[#allocation10 + $0xb8] sm:$0xff]
        %v1818 = vld [vmem:[#allocation10 + $0xc0] sm:$0xff]
        %v1819 = vld [vmem:[#allocation10 + $0xc8] sm:$0xff]
        %v1820 = vld [vmem:[#allocation10 + $0xd0] sm:$0xff]
        %v1821 = vld [vmem:[#allocation10 + $0xd8] sm:$0xff]
        %v1822 = vld [vmem:[#allocation10 + $0xe0] sm:$0xff]
        %v1823 = vld [vmem:[#allocation10 + $0xe8] sm:$0xff]
        %v1824 = vld [vmem:[#allocation10 + $0xf0] sm:$0xff]
        %v1825 = vld [vmem:[#allocation10 + $0xf8] sm:$0xff]
        %v1826 = vld [vmem:[#allocation10 + $0x100] sm:$0xff]
        %v1827 = vld [vmem:[#allocation10 + $0x108] sm:$0xff]
        %v1828 = vld [vmem:[#allocation10 + $0x110] sm:$0xff]
        %v1829 = vld [vmem:[#allocation10 + $0x118] sm:$0xff]
        %v1830 = vld [vmem:[#allocation10 + $0x120] sm:$0xff]
        %v1831 = vld [vmem:[#allocation10 + $0x128] sm:$0xff]
        %v1832 = vld [vmem:[#allocation10 + $0x130] sm:$0xff]
        %v1833 = vld [vmem:[#allocation10 + $0x138] sm:$0xff]
        %v1834 = vld [vmem:[#allocation10 + $0x140] sm:$0xff]
        %v1835 = vld [vmem:[#allocation10 + $0x148] sm:$0xff]
        %v1836 = vld [vmem:[#allocation10 + $0x150] sm:$0xff]
        %v1837 = vld [vmem:[#allocation10 + $0x158] sm:$0xff]
        %v1838 = vld [vmem:[#allocation10 + $0x160] sm:$0xff]
        %v1839 = vld [vmem:[#allocation10 + $0x168] sm:$0xff]
        %v1840 = vld [vmem:[#allocation10 + $0x170] sm:$0xff]
        %v1841 = vld [vmem:[#allocation10 + $0x178] sm:$0xff]
        %v1842 = vld [vmem:[#allocation10 + $0x180] sm:$0xff]
        %v1843 = vld [vmem:[#allocation10 + $0x188] sm:$0xff]
        %v1844 = vld [vmem:[#allocation10 + $0x190] sm:$0xff]
        %v1845 = vld [vmem:[#allocation10 + $0x198] sm:$0xff]
        %v1846 = vld [vmem:[#allocation10 + $0x1a0] sm:$0xff]
        %v1847 = vld [vmem:[#allocation10 + $0x1a8] sm:$0xff]
        %v1848 = vld [vmem:[#allocation10 + $0x1b0] sm:$0xff]
        %v1849 = vld [vmem:[#allocation10 + $0x1b8] sm:$0xff]
        %v1850 = vld [vmem:[#allocation10 + $0x1c0] sm:$0xff]
        %v1851 = vld [vmem:[#allocation10 + $0x1c8] sm:$0xff]
        %v1852 = vld [vmem:[#allocation10 + $0x1d0] sm:$0xff]
        %v1853 = vld [vmem:[#allocation10 + $0x1d8] sm:$0xff]
        %v1854 = vld [vmem:[#allocation10 + $0x1e0] sm:$0xff]
        %v1855 = vld [vmem:[#allocation10 + $0x1e8] sm:$0xff]
        %v1856 = vld [vmem:[#allocation10 + $0x1f0] sm:$0xff]
        %v1857 = vld [vmem:[#allocation10 + $0x1f8] sm:$0xff]
        %v1858 = vld [vmem:[#allocation10 + $0x200] sm:$0xff]
        %v1859 = vld [vmem:[#allocation10 + $0x208] sm:$0xff]
        %v1860 = vld [vmem:[#allocation10 + $0x210] sm:$0xff]
        %v1861 = vld [vmem:[#allocation10 + $0x218] sm:$0xff]
        %v1862 = vld [vmem:[#allocation10 + $0x220] sm:$0xff]
        %v1863 = vld [vmem:[#allocation10 + $0x228] sm:$0xff]
        %v1864 = vld [vmem:[#allocation10 + $0x230] sm:$0xff]
        %v1865 = vld [vmem:[#allocation10 + $0x238] sm:$0xff]
        %v1866 = vld [vmem:[#allocation10 + $0x240] sm:$0xff]
        %v1867 = vld [vmem:[#allocation10 + $0x248] sm:$0xff]
        %v1868 = vld [vmem:[#allocation10 + $0x250] sm:$0xff]
        %v1869 = vld [vmem:[#allocation10 + $0x258] sm:$0xff]
        %v1870 = vld [vmem:[#allocation10 + $0x260] sm:$0xff]
        %v1871 = vld [vmem:[#allocation10 + $0x268] sm:$0xff]
        %v1872 = vld [vmem:[#allocation10 + $0x270] sm:$0xff]
        %v1873 = vld [vmem:[#allocation10 + $0x278] sm:$0xff]
        %v1874 = vld [vmem:[#allocation10 + $0x280] sm:$0xff]
        %v1875 = vld [vmem:[#allocation10 + $0x288] sm:$0xff]
        %v1876 = vld [vmem:[#allocation10 + $0x290] sm:$0xff]
        %v1877 = vld [vmem:[#allocation10 + $0x298] sm:$0xff]
        %v1878 = vld [vmem:[#allocation10 + $0x2a0] sm:$0xff]
        %v1879 = vld [vmem:[#allocation10 + $0x2a8] sm:$0xff]
        %v1880 = vld [vmem:[#allocation10 + $0x2b0] sm:$0xff]
        %v1881 = vld [vmem:[#allocation10 + $0x2b8] sm:$0xff]
        %v1882 = vld [vmem:[#allocation10 + $0x2c0] sm:$0xff]
        %v1883 = vld [vmem:[#allocation10 + $0x2c8] sm:$0xff]
        %v1884 = vld [vmem:[#allocation10 + $0x2d0] sm:$0xff]
        %v1885 = vld [vmem:[#allocation10 + $0x2d8] sm:$0xff]
        %v1886 = vld [vmem:[#allocation10 + $0x2e0] sm:$0xff]
        %v1887 = vld [vmem:[#allocation10 + $0x2e8] sm:$0xff]
        %v1888 = vld [vmem:[#allocation10 + $0x2f0] sm:$0xff]
        %v1889 = vld [vmem:[#allocation10 + $0x2f8] sm:$0xff]
        %v1890 = vld [vmem:[#allocation10 + $0x300] sm:$0xff]
        %v1891 = vld [vmem:[#allocation10 + $0x308] sm:$0xff]
        %v1892 = vld [vmem:[#allocation10 + $0x310] sm:$0xff]
        %v1893 = vld [vmem:[#allocation10 + $0x318] sm:$0xff]
        %v1894 = vld [vmem:[#allocation10 + $0x320] sm:$0xff]
        %v1895 = vld [vmem:[#allocation10 + $0x328] sm:$0xff]
        %v1896 = vld [vmem:[#allocation10 + $0x330] sm:$0xff]
        %v1897 = vld [vmem:[#allocation10 + $0x338] sm:$0xff]
        %v1898 = vld [vmem:[#allocation10 + $0x340] sm:$0xff]
        %v1899 = vld [vmem:[#allocation10 + $0x348] sm:$0xff]
        %v1900 = vld [vmem:[#allocation10 + $0x350] sm:$0xff]
        %v1901 = vld [vmem:[#allocation10 + $0x358] sm:$0xff]
        %v1902 = vld [vmem:[#allocation10 + $0x360] sm:$0xff]
        %v1903 = vld [vmem:[#allocation10 + $0x368] sm:$0xff]
        %v1904 = vld [vmem:[#allocation10 + $0x370] sm:$0xff]
        %v1905 = vld [vmem:[#allocation10 + $0x378] sm:$0xff]
        %v1906 = vld [vmem:[#allocation10 + $0x380] sm:$0xff]
        %v1907 = vld [vmem:[#allocation10 + $0x388] sm:$0xff]
        %v1908 = vld [vmem:[#allocation10 + $0x390] sm:$0xff]
        %v1909 = vld [vmem:[#allocation10 + $0x398] sm:$0xff]
        %v1910 = vld [vmem:[#allocation10 + $0x3a0] sm:$0xff]
        %v1911 = vld [vmem:[#allocation10 + $0x3a8] sm:$0xff]
        %v1912 = vld [vmem:[#allocation10 + $0x3b0] sm:$0xff]
        %v1913 = vld [vmem:[#allocation10 + $0x3b8] sm:$0xff]
        %v1914 = vld [vmem:[#allocation10 + $0x3c0] sm:$0xff]
        %v1915 = vld [vmem:[#allocation10 + $0x3c8] sm:$0xff]
        %v1916 = vld [vmem:[#allocation10 + $0x3d0] sm:$0xff]
        %v1917 = vld [vmem:[#allocation10 + $0x3d8] sm:$0xff]
        %v1918 = vld [vmem:[#allocation10 + $0x3e0] sm:$0xff]
        %v1919 = vld [vmem:[#allocation10 + $0x3e8] sm:$0xff]
        %v1920 = vld [vmem:[#allocation10 + $0x3f0] sm:$0xff]
        %v1921 = vld [vmem:[#allocation10 + $0x3f8] sm:$0xff]
        %v1922 = vld [vmem:[%s17] sm:$0xf]
        %v1924 = vlaneseq
        %v1925 = vshrl.u32 %v1924, 7
        %v1926 = vsub.s32 0, %v1925
        %v1927 = vrot.slane %v1922, %v1926
        %v1928 = vlaneseq
        %v1929 = vshrl.u32 %v1928, 7
        %v1930 = vsub.s32 1, %v1929
        %v1931 = vrot.slane %v1922, %v1930
        %v1932 = vlaneseq
        %v1933 = vshrl.u32 %v1932, 7
        %v1934 = vsub.s32 2, %v1933
        %v1935 = vrot.slane %v1922, %v1934
        %v1936 = vlaneseq
        %v1937 = vshrl.u32 %v1936, 7
        %v1938 = vsub.s32 3, %v1937
        %v1939 = vrot.slane %v1922, %v1938
        %1944 = vmatprep.subr.mxu0 %v1795
        %1945 = vmatpush1.msra.mxu0 %v1794
        %1946 = vmatprep.subr.mxu0 %v1799
        %1947 = vmatpush1.msra.mxu0 %v1798
        %1948 = vmatprep.subr.mxu0 %v1803
        %1949 = vmatpush1.msra.mxu0 %v1802
        %1950 = vmatprep.subr.mxu0 %v1807
        %1951 = vmatpush1.msra.mxu0 %v1806
        %1952 = vmatprep.subr.mxu0 %v1811
        %1953 = vmatpush1.msra.mxu0 %v1810
        %1954 = vmatprep.subr.mxu0 %v1815
        %1955 = vmatpush1.msra.mxu0 %v1814
        %1956 = vmatprep.subr.mxu0 %v1819
        %1957 = vmatpush1.msra.mxu0 %v1818
        %1958 = vmatprep.subr.mxu0 %v1823
        %1959 = vmatpush1.msra.mxu0 %v1822
        %1960 = vmatprep.subr.mxu0 %v1827
        %1961 = vmatpush1.msra.mxu0 %v1826
        %1962 = vmatprep.subr.mxu0 %v1831
        %1963 = vmatpush1.msra.mxu0 %v1830
        %1964 = vmatprep.subr.mxu0 %v1835
        %1965 = vmatpush1.msra.mxu0 %v1834
        %1966 = vmatprep.subr.mxu0 %v1839
        %1967 = vmatpush1.msra.mxu0 %v1838
        %1968 = vmatprep.subr.mxu0 %v1843
        %1969 = vmatpush1.msra.mxu0 %v1842
        %1970 = vmatprep.subr.mxu0 %v1847
        %1971 = vmatpush1.msra.mxu0 %v1846
        %1972 = vmatprep.subr.mxu0 %v1851
        %1973 = vmatpush1.msra.mxu0 %v1850
        %1974 = vmatprep.subr.mxu0 %v1855
        %1975 = vmatpush1.msra.mxu0 %v1854
        %1976 = vmatprep.subr.mxu0 %v1859
        %1977 = vmatpush1.msra.mxu0 %v1858
        %1978 = vmatprep.subr.mxu0 %v1863
        %1979 = vmatpush1.msra.mxu0 %v1862
        %1980 = vmatprep.subr.mxu0 %v1867
        %1981 = vmatpush1.msra.mxu0 %v1866
        %1982 = vmatprep.subr.mxu0 %v1871
        %1983 = vmatpush1.msra.mxu0 %v1870
        %1984 = vmatprep.subr.mxu0 %v1875
        %1985 = vmatpush1.msra.mxu0 %v1874
        %1986 = vmatprep.subr.mxu0 %v1879
        %1987 = vmatpush1.msra.mxu0 %v1878
        %1988 = vmatprep.subr.mxu0 %v1883
        %1989 = vmatpush1.msra.mxu0 %v1882
        %1990 = vmatprep.subr.mxu0 %v1887
        %1991 = vmatpush1.msra.mxu0 %v1886
        %1992 = vmatprep.subr.mxu0 %v1891
        %1993 = vmatpush1.msra.mxu0 %v1890
        %1994 = vmatprep.subr.mxu0 %v1895
        %1995 = vmatpush1.msra.mxu0 %v1894
        %1996 = vmatprep.subr.mxu0 %v1899
        %1997 = vmatpush1.msra.mxu0 %v1898
        %1998 = vmatprep.subr.mxu0 %v1903
        %1999 = vmatpush1.msra.mxu0 %v1902
        %2000 = vmatprep.subr.mxu0 %v1907
        %2001 = vmatpush1.msra.mxu0 %v1906
        %2002 = vmatprep.subr.mxu0 %v1911
        %2003 = vmatpush1.msra.mxu0 %v1910
        %2004 = vmatprep.subr.mxu0 %v1915
        %2005 = vmatpush1.msra.mxu0 %v1914
        %2006 = vmatprep.subr.mxu0 %v1919
        %2007 = vmatpush1.msra.mxu0 %v1918
        %2008 = vmatprep.mubr.f32.mxu0 %v1793
        %2009 = vmatmul.mubr.f32.gmra.mrb[0].mxu0 %v1792
        %v2010 = vpop.f32.mrb[0].mxu0
        %v2011 = vadd.f32 %v1927, %v2010
        %v2012 = vpop.f32.mrb[0].mxu0
        %v2013 = vadd.f32 %v1931, %v2012
        %2014 = vdwg.mxu0
        %2015 = vmatprep.subr.mxu0 %v1797
        %2016 = vmatpush1.msra.mxu0 %v1796
        %2017 = vmatprep.subr.mxu0 %v1801
        %2018 = vmatpush1.msra.mxu0 %v1800
        %2019 = vmatprep.subr.mxu0 %v1805
        %2020 = vmatpush1.msra.mxu0 %v1804
        %2021 = vmatprep.subr.mxu0 %v1809
        %2022 = vmatpush1.msra.mxu0 %v1808
        %2023 = vmatprep.subr.mxu0 %v1813
        %2024 = vmatpush1.msra.mxu0 %v1812
        %2025 = vmatprep.subr.mxu0 %v1817
        %2026 = vmatpush1.msra.mxu0 %v1816
        %2027 = vmatprep.subr.mxu0 %v1821
        %2028 = vmatpush1.msra.mxu0 %v1820
        %2029 = vmatprep.subr.mxu0 %v1825
        %2030 = vmatpush1.msra.mxu0 %v1824
        %2031 = vmatprep.subr.mxu0 %v1829
        %2032 = vmatpush1.msra.mxu0 %v1828
        %2033 = vmatprep.subr.mxu0 %v1833
        %2034 = vmatpush1.msra.mxu0 %v1832
        %2035 = vmatprep.subr.mxu0 %v1837
        %2036 = vmatpush1.msra.mxu0 %v1836
        %2037 = vmatprep.subr.mxu0 %v1841
        %2038 = vmatpush1.msra.mxu0 %v1840
        %2039 = vmatprep.subr.mxu0 %v1845
        %2040 = vmatpush1.msra.mxu0 %v1844
        %2041 = vmatprep.subr.mxu0 %v1849
        %2042 = vmatpush1.msra.mxu0 %v1848
        %2043 = vmatprep.subr.mxu0 %v1853
        %2044 = vmatpush1.msra.mxu0 %v1852
        %2045 = vmatprep.subr.mxu0 %v1857
        %2046 = vmatpush1.msra.mxu0 %v1856
        %2047 = vmatprep.subr.mxu0 %v1861
        %2048 = vmatpush1.msra.mxu0 %v1860
        %2049 = vmatprep.subr.mxu0 %v1865
        %2050 = vmatpush1.msra.mxu0 %v1864
        %2051 = vmatprep.subr.mxu0 %v1869
        %2052 = vmatpush1.msra.mxu0 %v1868
        %2053 = vmatprep.subr.mxu0 %v1873
        %2054 = vmatpush1.msra.mxu0 %v1872
        %2055 = vmatprep.subr.mxu0 %v1877
        %2056 = vmatpush1.msra.mxu0 %v1876
        %2057 = vmatprep.subr.mxu0 %v1881
        %2058 = vmatpush1.msra.mxu0 %v1880
        %2059 = vmatprep.subr.mxu0 %v1885
        %2060 = vmatpush1.msra.mxu0 %v1884
        %2061 = vmatprep.subr.mxu0 %v1889
        %2062 = vmatpush1.msra.mxu0 %v1888
        %2063 = vmatprep.subr.mxu0 %v1893
        %2064 = vmatpush1.msra.mxu0 %v1892
        %2065 = vmatprep.subr.mxu0 %v1897
        %2066 = vmatpush1.msra.mxu0 %v1896
        %2067 = vmatprep.subr.mxu0 %v1901
        %2068 = vmatpush1.msra.mxu0 %v1900
        %2069 = vmatprep.subr.mxu0 %v1905
        %2070 = vmatpush1.msra.mxu0 %v1904
        %2071 = vmatprep.subr.mxu0 %v1909
        %2072 = vmatpush1.msra.mxu0 %v1908
        %2073 = vmatprep.subr.mxu0 %v1913
        %2074 = vmatpush1.msra.mxu0 %v1912
        %2075 = vmatprep.subr.mxu0 %v1917
        %2076 = vmatpush1.msra.mxu0 %v1916
        %2077 = vmatprep.subr.mxu0 %v1921
        %2078 = vmatpush1.msra.mxu0 %v1920
        %2079 = vmatprep.mubr.f32.mxu0 %v1793
        %2080 = vmatmul.mubr.f32.gmra.mrb[0].mxu0 %v1792
        %v2081 = vpop.f32.mrb[0].mxu0
        %v2082 = vadd.f32 %v1935, %v2081
        %v2083 = vpop.f32.mrb[0].mxu0
        %v2084 = vadd.f32 %v1939, %v2083
        %2085 = vdwg.mxu0
        %v2086 = vmax.f32 %v2011, 0.0
        %v2087 = vmax.f32 %v2013, 0.0
        %v2088 = vmax.f32 %v2082, 0.0
        %v2089 = vmax.f32 %v2084, 0.0
        %v2090 = vld [vmem:[#allocation11] sm:$0xff]
        %v2091 = vld [vmem:[#allocation11 + $0x8] sm:$0xff]
        %v2092 = vld [vmem:[#allocation11 + $0x10] sm:$0xff]
        %v2093 = vld [vmem:[#allocation11 + $0x18] sm:$0xff]
        %v2094 = vld [vmem:[#allocation11 + $0x20] sm:$0xff]
        %v2095 = vld [vmem:[#allocation11 + $0x28] sm:$0xff]
        %v2096 = vld [vmem:[#allocation11 + $0x30] sm:$0xff]
        %v2097 = vld [vmem:[#allocation11 + $0x38] sm:$0xff]
        %v2098 = vld [vmem:[#allocation11 + $0x40] sm:$0xff]
        %v2099 = vld [vmem:[#allocation11 + $0x48] sm:$0xff]
        %v2100 = vld [vmem:[#allocation11 + $0x50] sm:$0xff]
        %v2101 = vld [vmem:[#allocation11 + $0x58] sm:$0xff]
        %v2102 = vld [vmem:[#allocation11 + $0x60] sm:$0xff]
        %v2103 = vld [vmem:[#allocation11 + $0x68] sm:$0xff]
        %v2104 = vld [vmem:[#allocation11 + $0x70] sm:$0xff]
        %v2105 = vld [vmem:[#allocation11 + $0x78] sm:$0xff]
        %v2106 = vld [vmem:[#allocation11 + $0x80] sm:$0xff]
        %v2107 = vld [vmem:[#allocation11 + $0x88] sm:$0xff]
        %v2108 = vld [vmem:[#allocation11 + $0x90] sm:$0xff]
        %v2109 = vld [vmem:[#allocation11 + $0x98] sm:$0xff]
        %v2110 = vld [vmem:[#allocation11 + $0xa0] sm:$0xff]
        %v2111 = vld [vmem:[#allocation11 + $0xa8] sm:$0xff]
        %v2112 = vld [vmem:[#allocation11 + $0xb0] sm:$0xff]
        %v2113 = vld [vmem:[#allocation11 + $0xb8] sm:$0xff]
        %v2114 = vld [vmem:[#allocation11 + $0xc0] sm:$0xff]
        %v2115 = vld [vmem:[#allocation11 + $0xc8] sm:$0xff]
        %v2116 = vld [vmem:[#allocation11 + $0xd0] sm:$0xff]
        %v2117 = vld [vmem:[#allocation11 + $0xd8] sm:$0xff]
        %v2118 = vld [vmem:[#allocation11 + $0xe0] sm:$0xff]
        %v2119 = vld [vmem:[#allocation11 + $0xe8] sm:$0xff]
        %v2120 = vld [vmem:[#allocation11 + $0xf0] sm:$0xff]
        %v2121 = vld [vmem:[#allocation11 + $0xf8] sm:$0xff]
        %v2122 = vld [vmem:[#allocation11 + $0x100] sm:$0xff]
        %v2123 = vld [vmem:[#allocation11 + $0x108] sm:$0xff]
        %v2124 = vld [vmem:[#allocation11 + $0x110] sm:$0xff]
        %v2125 = vld [vmem:[#allocation11 + $0x118] sm:$0xff]
        %v2126 = vld [vmem:[#allocation11 + $0x120] sm:$0xff]
        %v2127 = vld [vmem:[#allocation11 + $0x128] sm:$0xff]
        %v2128 = vld [vmem:[#allocation11 + $0x130] sm:$0xff]
        %v2129 = vld [vmem:[#allocation11 + $0x138] sm:$0xff]
        %v2130 = vld [vmem:[#allocation11 + $0x140] sm:$0xff]
        %v2131 = vld [vmem:[#allocation11 + $0x148] sm:$0xff]
        %v2132 = vld [vmem:[#allocation11 + $0x150] sm:$0xff]
        %v2133 = vld [vmem:[#allocation11 + $0x158] sm:$0xff]
        %v2134 = vld [vmem:[#allocation11 + $0x160] sm:$0xff]
        %v2135 = vld [vmem:[#allocation11 + $0x168] sm:$0xff]
        %v2136 = vld [vmem:[#allocation11 + $0x170] sm:$0xff]
        %v2137 = vld [vmem:[#allocation11 + $0x178] sm:$0xff]
        %v2138 = vld [vmem:[#allocation11 + $0x180] sm:$0xff]
        %v2139 = vld [vmem:[#allocation11 + $0x188] sm:$0xff]
        %v2140 = vld [vmem:[#allocation11 + $0x190] sm:$0xff]
        %v2141 = vld [vmem:[#allocation11 + $0x198] sm:$0xff]
        %v2142 = vld [vmem:[#allocation11 + $0x1a0] sm:$0xff]
        %v2143 = vld [vmem:[#allocation11 + $0x1a8] sm:$0xff]
        %v2144 = vld [vmem:[#allocation11 + $0x1b0] sm:$0xff]
        %v2145 = vld [vmem:[#allocation11 + $0x1b8] sm:$0xff]
        %v2146 = vld [vmem:[#allocation11 + $0x1c0] sm:$0xff]
        %v2147 = vld [vmem:[#allocation11 + $0x1c8] sm:$0xff]
        %v2148 = vld [vmem:[#allocation11 + $0x1d0] sm:$0xff]
        %v2149 = vld [vmem:[#allocation11 + $0x1d8] sm:$0xff]
        %v2150 = vld [vmem:[#allocation11 + $0x1e0] sm:$0xff]
        %v2151 = vld [vmem:[#allocation11 + $0x1e8] sm:$0xff]
        %v2152 = vld [vmem:[#allocation11 + $0x1f0] sm:$0xff]
        %v2153 = vld [vmem:[#allocation11 + $0x1f8] sm:$0xff]
        %v2154 = vld [vmem:[%s19] sm:$0x1]
        %v2156 = vlaneseq
        %v2157 = vshrl.u32 %v2156, 7
        %v2158 = vsub.s32 0, %v2157
        %v2159 = vrot.slane %v2154, %v2158
        %2161 = vmatprep.subr.mxu0 0.0
        %2162 = vmatpush1.msra.mxu0 %v2090
        %2163 = vmatprep.subr.mxu0 0.0
        %2164 = vmatpush1.msra.mxu0 %v2091
        %2165 = vmatprep.subr.mxu0 0.0
        %2166 = vmatpush1.msra.mxu0 %v2092
        %2167 = vmatprep.subr.mxu0 0.0
        %2168 = vmatpush1.msra.mxu0 %v2093
        %2169 = vmatprep.subr.mxu0 0.0
        %2170 = vmatpush1.msra.mxu0 %v2094
        %2171 = vmatprep.subr.mxu0 0.0
        %2172 = vmatpush1.msra.mxu0 %v2095
        %2173 = vmatprep.subr.mxu0 0.0
        %2174 = vmatpush1.msra.mxu0 %v2096
        %2175 = vmatprep.subr.mxu0 0.0
        %2176 = vmatpush1.msra.mxu0 %v2097
        %2177 = vmatprep.subr.mxu0 0.0
        %2178 = vmatpush1.msra.mxu0 %v2098
        %2179 = vmatprep.subr.mxu0 0.0
        %2180 = vmatpush1.msra.mxu0 %v2099
        %2181 = vmatprep.subr.mxu0 0.0
        %2182 = vmatpush1.msra.mxu0 %v2100
        %2183 = vmatprep.subr.mxu0 0.0
        %2184 = vmatpush1.msra.mxu0 %v2101
        %2185 = vmatprep.subr.mxu0 0.0
        %2186 = vmatpush1.msra.mxu0 %v2102
        %2187 = vmatprep.subr.mxu0 0.0
        %2188 = vmatpush1.msra.mxu0 %v2103
        %2189 = vmatprep.subr.mxu0 0.0
        %2190 = vmatpush1.msra.mxu0 %v2104
        %2191 = vmatprep.subr.mxu0 0.0
        %2192 = vmatpush1.msra.mxu0 %v2105
        %2193 = vmatprep.subr.mxu0 0.0
        %2194 = vmatpush1.msra.mxu0 %v2106
        %2195 = vmatprep.subr.mxu0 0.0
        %2196 = vmatpush1.msra.mxu0 %v2107
        %2197 = vmatprep.subr.mxu0 0.0
        %2198 = vmatpush1.msra.mxu0 %v2108
        %2199 = vmatprep.subr.mxu0 0.0
        %2200 = vmatpush1.msra.mxu0 %v2109
        %2201 = vmatprep.subr.mxu0 0.0
        %2202 = vmatpush1.msra.mxu0 %v2110
        %2203 = vmatprep.subr.mxu0 0.0
        %2204 = vmatpush1.msra.mxu0 %v2111
        %2205 = vmatprep.subr.mxu0 0.0
        %2206 = vmatpush1.msra.mxu0 %v2112
        %2207 = vmatprep.subr.mxu0 0.0
        %2208 = vmatpush1.msra.mxu0 %v2113
        %2209 = vmatprep.subr.mxu0 0.0
        %2210 = vmatpush1.msra.mxu0 %v2114
        %2211 = vmatprep.subr.mxu0 0.0
        %2212 = vmatpush1.msra.mxu0 %v2115
        %2213 = vmatprep.subr.mxu0 0.0
        %2214 = vmatpush1.msra.mxu0 %v2116
        %2215 = vmatprep.subr.mxu0 0.0
        %2216 = vmatpush1.msra.mxu0 %v2117
        %2217 = vmatprep.subr.mxu0 0.0
        %2218 = vmatpush1.msra.mxu0 %v2118
        %2219 = vmatprep.subr.mxu0 0.0
        %2220 = vmatpush1.msra.mxu0 %v2119
        %2221 = vmatprep.subr.mxu0 0.0
        %2222 = vmatpush1.msra.mxu0 %v2120
        %2223 = vmatprep.subr.mxu0 0.0
        %2224 = vmatpush1.msra.mxu0 %v2121
        %2225 = vmatprep.mubr.f32.mxu0 %v2087
        %2226 = vmatmul.mubr.f32.gmra.mrb[0].mxu0 %v2086
        %v2227 = vpop.f32.mrb[0].mxu0
        %v2228 = vadd.f32 %v2159, %v2227
        %v2229 = vpop.f32.mrb[0].mxu0
        %2230 = vdwg.mxu0
        %2231 = vmatprep.subr.mxu0 0.0
        %2232 = vmatpush1.msra.mxu0 %v2122
        %2233 = vmatprep.subr.mxu0 0.0
        %2234 = vmatpush1.msra.mxu0 %v2123
        %2235 = vmatprep.subr.mxu0 0.0
        %2236 = vmatpush1.msra.mxu0 %v2124
        %2237 = vmatprep.subr.mxu0 0.0
        %2238 = vmatpush1.msra.mxu0 %v2125
        %2239 = vmatprep.subr.mxu0 0.0
        %2240 = vmatpush1.msra.mxu0 %v2126
        %2241 = vmatprep.subr.mxu0 0.0
        %2242 = vmatpush1.msra.mxu0 %v2127
        %2243 = vmatprep.subr.mxu0 0.0
        %2244 = vmatpush1.msra.mxu0 %v2128
        %2245 = vmatprep.subr.mxu0 0.0
        %2246 = vmatpush1.msra.mxu0 %v2129
        %2247 = vmatprep.subr.mxu0 0.0
        %2248 = vmatpush1.msra.mxu0 %v2130
        %2249 = vmatprep.subr.mxu0 0.0
        %2250 = vmatpush1.msra.mxu0 %v2131
        %2251 = vmatprep.subr.mxu0 0.0
        %2252 = vmatpush1.msra.mxu0 %v2132
        %2253 = vmatprep.subr.mxu0 0.0
        %2254 = vmatpush1.msra.mxu0 %v2133
        %2255 = vmatprep.subr.mxu0 0.0
        %2256 = vmatpush1.msra.mxu0 %v2134
        %2257 = vmatprep.subr.mxu0 0.0
        %2258 = vmatpush1.msra.mxu0 %v2135
        %2259 = vmatprep.subr.mxu0 0.0
        %2260 = vmatpush1.msra.mxu0 %v2136
        %2261 = vmatprep.subr.mxu0 0.0
        %2262 = vmatpush1.msra.mxu0 %v2137
        %2263 = vmatprep.subr.mxu0 0.0
        %2264 = vmatpush1.msra.mxu0 %v2138
        %2265 = vmatprep.subr.mxu0 0.0
        %2266 = vmatpush1.msra.mxu0 %v2139
        %2267 = vmatprep.subr.mxu0 0.0
        %2268 = vmatpush1.msra.mxu0 %v2140
        %2269 = vmatprep.subr.mxu0 0.0
        %2270 = vmatpush1.msra.mxu0 %v2141
        %2271 = vmatprep.subr.mxu0 0.0
        %2272 = vmatpush1.msra.mxu0 %v2142
        %2273 = vmatprep.subr.mxu0 0.0
        %2274 = vmatpush1.msra.mxu0 %v2143
        %2275 = vmatprep.subr.mxu0 0.0
        %2276 = vmatpush1.msra.mxu0 %v2144
        %2277 = vmatprep.subr.mxu0 0.0
        %2278 = vmatpush1.msra.mxu0 %v2145
        %2279 = vmatprep.subr.mxu0 0.0
        %2280 = vmatpush1.msra.mxu0 %v2146
        %2281 = vmatprep.subr.mxu0 0.0
        %2282 = vmatpush1.msra.mxu0 %v2147
        %2283 = vmatprep.subr.mxu0 0.0
        %2284 = vmatpush1.msra.mxu0 %v2148
        %2285 = vmatprep.subr.mxu0 0.0
        %2286 = vmatpush1.msra.mxu0 %v2149
        %2287 = vmatprep.subr.mxu0 0.0
        %2288 = vmatpush1.msra.mxu0 %v2150
        %2289 = vmatprep.subr.mxu0 0.0
        %2290 = vmatpush1.msra.mxu0 %v2151
        %2291 = vmatprep.subr.mxu0 0.0
        %2292 = vmatpush1.msra.mxu0 %v2152
        %2293 = vmatprep.subr.mxu0 0.0
        %2294 = vmatpush1.msra.mxu0 %v2153
        %2295 = vmatprep.mubr.f32.mxu0 %v2089
        %2296 = vmatmul.mubr.f32.gmra.mrb[0].mxu0 %v2088
        %v2297 = vpop.f32.mrb[0].mxu0
        %v2298 = vadd.f32 %v2228, %v2297
        %v2299 = vpop.f32.mrb[0].mxu0
        %2300 = vdwg.mxu0
        %2301 = vst [vmem:[%s752] sm:$0xff] %v2298
        %s2302 = sand.u32 %s481, 1
        %s2303 = scalar_lea.sflag [#allocation4], %s2302
        %s2304 = sand.u32 %s481, 1
        %s2305 = smul.addr %s2304, 8
        %s2306 = scalar_lea.vmem [#allocation13], %s2305
        %s2307 = sand.u32 %s507, 1
        %s2308 = scalar_lea.sflag [#allocation15], %s2307
        %s2309 = sand.u32 %s507, 1
        %s2310 = smul.addr %s2309, 8
        %s2311 = scalar_lea.vmem [#allocation14], %s2310
        // Predicated region
        $region125: #{tpu_custom_call.1} parent=99 // pred_check
          %p2312 = pneg %p491
        $region126: #{tpu_custom_call.1} parent=99 // pred_check_branch
          %2314 = sbr.rel (%p2312) target = $region128
        $region127: #{tpu_custom_call.1} parent=99 // pred_region
          %s2316 = ssub.s32 128, 128
          %2317 = vsyncadd %s2303, %s2316
          %s2318 = smul.addr %s43, 128
          %s2319 = scalar_lea.hbm %s20, %s2318
          %s2321 = sshll.u32 %s2306, 4
          %s2322 = int_to_ptr.vmem [resolvable:$true] %s2321
          %2324 = dma.vmem_to_hbm [thread:$0]  %s2322, 128, %s2319, %s2303
        $region128: #{tpu_custom_call.1} parent=99 // pred_fallthru
          _
        // Predicated region
        $region129: #{tpu_custom_call.1} parent=99 // pred_check
          %p2325 = pneg %p517
        $region130: #{tpu_custom_call.1} parent=99 // pred_check_branch
          %2327 = sbr.rel (%p2325) target = $region132
        $region131: #{tpu_custom_call.1} parent=99 // pred_region
          %s2329 = ssub.s32 128, 128
          %2330 = vsyncadd %s2308, %s2329
          %s2331 = smul.addr %s43, 128
          %s2332 = scalar_lea.hbm %s21, %s2331
          %s2334 = sshll.u32 %s2311, 4
          %s2335 = int_to_ptr.vmem [resolvable:$true] %s2334
          %2337 = dma.vmem_to_hbm [thread:$0]  %s2335, 128, %s2332, %s2308
        $region132: #{tpu_custom_call.1} parent=99 // pred_fallthru
          _
      $region100: #{tpu_custom_call.1} parent=5 // pred_fallthru
        _
      %p2338 = scmp.le.s32.totalorder 2, %s38
      // Predicated region
      $region133: #{tpu_custom_call.1} parent=5 // pred_check
        %p2339 = pneg %p2338
      $region134: #{tpu_custom_call.1} parent=5 // pred_check_branch
        %2341 = sbr.rel (%p2339) target = $region136
      $region135: #{tpu_custom_call.1} parent=5 // pred_region
        %s2342 = ssub.s32 %s38, 2
        // Predicated region
        $region137: #{tpu_custom_call.1} parent=135 // pred_check
          %p2343 = pneg %p497
        $region138: #{tpu_custom_call.1} parent=135 // pred_check_branch
          %2345 = sbr.rel (%p2343) target = $region140
        $region139: #{tpu_custom_call.1} parent=135 // pred_region
          %s2346 = sand.u32 %s482, 1
          %s2347 = scalar_lea.sflag [#allocation4], %s2346
          %s2348 = sand.u32 %s482, 1
          %s2349 = smul.addr %s2348, 8
          %s2350 = scalar_lea.vmem [#allocation13], %s2349
          %2351 = dma.done %s2347, 128
        $region140: #{tpu_custom_call.1} parent=135 // pred_fallthru
          _
        // Predicated region
        $region141: #{tpu_custom_call.1} parent=135 // pred_check
          %p2352 = pneg %p523
        $region142: #{tpu_custom_call.1} parent=135 // pred_check_branch
          %2354 = sbr.rel (%p2352) target = $region144
        $region143: #{tpu_custom_call.1} parent=135 // pred_region
          %s2355 = sand.u32 %s508, 1
          %s2356 = scalar_lea.sflag [#allocation15], %s2355
          %s2357 = sand.u32 %s508, 1
          %s2358 = smul.addr %s2357, 8
          %s2359 = scalar_lea.vmem [#allocation14], %s2358
          %2360 = dma.done %s2356, 128
        $region144: #{tpu_custom_call.1} parent=135 // pred_fallthru
          _
      $region136: #{tpu_custom_call.1} parent=5 // pred_fallthru
        _
    $region6: #{tpu_custom_call.1} parent=1 // loop_footer
      %s42 = sadd.s32 1, %s38
    $region7: #{tpu_custom_call.1} parent=1 // loop_footer_branch
      %37 = sbr.rel target = $region3
    $region8: #{tpu_custom_call.1} parent=1 // loop_exit
      _
    %2361 = vsyncpa [#allocation3], 1
    %s2362 = scalar_lea.sflag [#allocation3], 1
    %2363 = vsyncpa %s2362, 1
    %2364 = vsyncpa [#allocation6], 1
    %2365 = vsyncpa [#allocation9], 1
    %2366 = vsyncpa [#allocation12], 1
    %2367 = vsyncpa [#allocation4], 1
    %s2368 = scalar_lea.sflag [#allocation4], 1
    %2369 = vsyncpa %s2368, 1
    %2370 = vsyncpa [#allocation15], 1
    %s2371 = scalar_lea.sflag [#allocation15], 1
    %2372 = vsyncpa %s2371, 1

</llo_original>
